<compile_context>
chip_gen: v5e
topology: v5e:2x2
jax: 0.10.0
libtpu: 0.0.40
codegen_flags: <defaults>
</compile_context>

<pallas_src>
import functools

import jax
import jax.numpy as jnp
from jax.experimental import pallas as pl
from jax.experimental.pallas import tpu as pltpu

LOGSCALE_FACTOR = 3.0


def _round_up(x, m):
    return (x + m - 1) // m * m


def _tpu_tuning(cout_pad):
    """Generation-aware scoped-VMEM budget and Cout tile width (safe fallbacks)."""
    vmem_cap = 64 * 1024 * 1024
    chip = ""
    try:
        info = pltpu.get_tpu_info()
        vmem_cap = int(getattr(info, "vmem_capacity_bytes", vmem_cap)) or vmem_cap
        chip = str(getattr(info, "chip_version", "")).lower()
    except Exception:
        pass
    # v5e/v6e: 128 MiB physical -> 96 MiB scoped; v7x: 64 MiB physical -> 48 MiB.
    vmem_limit = max(32 * 1024 * 1024, min((vmem_cap * 3) // 4, 96 * 1024 * 1024))
    # v5e's MXU is 128 wide: a 256-wide Cout tile doubles scratch/weight DMA for
    # no MXU-width benefit there.
    narrow_mxu = "5" in chip
    co_tile = 256 if (not narrow_mxu and cout_pad % 256 == 0) else 128
    return vmem_limit, co_tile


def _conv2dzero_kernel(x_ref, w_ref, b_ref, o_ref, xpad_ref, xim_ref, *,
                       KH, KW, ph, pw, fold_kh, compute_dtype):
    """One (batch element, Cout tile) per grid step.

    x_ref:    (1, H, W, Cin)              unpadded input tile (NHWC)
    w_ref:    (ndots, Kfold, co_tile)     scaled weights, bf16
                                          ndots=1, Kfold=KH*KW*Cin  (fold_kh)
                                          ndots=KH, Kfold=KW*Cin    (otherwise)
    b_ref:    (1, co_tile)                scaled bias, f32
    o_ref:    (1, Hout, Wm, co_tile)      output tile (lane-dense; Wm = rnd16(Wout))
    xpad_ref: (Hp, Wp, Cin) f32           zero-padded input plane (VMEM scratch)
    xim_ref:  (Hout|Hp, Wm, Kfold) bf16   im2col / KW-folded slab (VMEM scratch)
    """
    H, W, Cin = x_ref.shape[1], x_ref.shape[2], x_ref.shape[3]
    Hp, Wp = xpad_ref.shape[0], xpad_ref.shape[1]
    Hout, Wm, co_t = o_ref.shape[1], o_ref.shape[2], o_ref.shape[3]
    Kfold = xim_ref.shape[2]
    M = Hout * Wm

    # Scratch is (re)built only on the first Cout tile of each batch element and
    # persists across the sequential ("arbitrary") co grid axis.
    @pl.when(pl.program_id(1) == 0)
    def _build_im2col():
        # Halo-only zero fill: top/bottom rows (full width) + right columns; the
        # interior is then overwritten by the image copy, so every element of the
        # scratch is written exactly once and nothing stays uninitialized.
        if ph > 0:
            xpad_ref[0:ph] = jnp.zeros((ph, Wp, Cin), xpad_ref.dtype)
            xpad_ref[ph + H:Hp] = jnp.zeros((Hp - ph - H, Wp, Cin), xpad_ref.dtype)
        if Wp > W:
            xpad_ref[:, W:Wp, :] = jnp.zeros((Hp, Wp - W, Cin), xpad_ref.dtype)
        # Sublane-aligned only when W % 8 == 0; otherwise masked stores (still correct).
        xpad_ref[ph:ph + H, 0:W, :] = x_ref[0].astype(xpad_ref.dtype)

        # Hoisted out of the co loop: KW-1 rolls + KW plane casts once per batch elem.
        xp = xpad_ref[...]                                   # (Hp, Wp, Cin), f32
        for kw in range(KW):
            shift = (pw - kw) % Wp
            # Roll aligns input column (w + kw - pw) with output column w; wrapped /
            # halo columns land in the always-zero region [W, Wp) -> contribute 0.
            xr = pltpu.roll(xp, shift=shift, axis=1) if shift else xp
            xr = xr.astype(compute_dtype)                    # one cast per kw
            if fold_kh:
                for kh in range(KH):                         # full im2col: K = KH*KW*Cin
                    c0 = (kh * KW + kw) * Cin
                    xim_ref[:, :, c0:c0 + Cin] = xr[kh:kh + Hout, 0:Wm, :]
            else:                                            # KW folded only: K = KW*Cin
                xim_ref[:, :, kw * Cin:(kw + 1) * Cin] = xr[:, 0:Wm, :]

    # Hot loop per (n, co): 1 (fold_kh) or KH fat MXU dots with loop-carried f32
    # accumulation, then bias add and a lane-dense store.  No casts, no acc scratch.
    acc = None
    for d in range(w_ref.shape[0]):
        rows = xim_ref[d:d + Hout]                 # (Hout, Wm, Kfold) bf16, free slice
        rows = rows.reshape(M, Kfold)              # free view: Wm % 16 == 0
        tap = jnp.dot(rows, w_ref[d], preferred_element_type=jnp.float32)
        acc = tap if acc is None else acc + tap
    out = acc.reshape(Hout, Wm, co_t) + b_ref[...].reshape(1, 1, co_t)
    o_ref[0] = out.astype(o_ref.dtype)             # co_t in {128, 256}: unmasked vst


def conv2d_zero(x_nchw, weight_oihw, bias, logs, *,
                padding=(1, 1), stride=(1, 1), dilation=(1, 1), groups=1,
                logscale_factor=LOGSCALE_FACTOR, compute_dtype=jnp.bfloat16):
    """Forward pass of Conv2dZero. Inputs follow PyTorch conventions (NCHW / OIHW)."""
    N, Cin, H, W = x_nchw.shape
    Cout, Cin_w, KH, KW = weight_oihw.shape
    assert Cin == Cin_w, "channel mismatch"
    assert tuple(stride) == (1, 1) and tuple(dilation) == (1, 1) and groups == 1, (
        "Pallas kernel implements the Conv2dZero defaults: stride=1, dilation=1, groups=1")
    ph, pw = padding
    Hout = H + 2 * ph - KH + 1
    Wout = W + 2 * pw - KW + 1
    assert Hout >= 1 and Wout >= 1, "kernel larger than padded input"

    LANES = 128
    SUB_BF16 = 16                                  # bf16 sublane tile -> free reshapes
    Cout_pad = _round_up(Cout, LANES)
    vmem_limit, co_tile = _tpu_tuning(Cout_pad)
    n_co = Cout_pad // co_tile

    Hp = H + 2 * ph
    Wp = _round_up(W + 2 * pw, SUB_BF16)           # padded-plane width (roll modulus)
    Wm = _round_up(Wout, SUB_BF16)                 # matmul / output-store width
    # Roll-wrap halo trick requires wrapped left-halo reads to land in the always-zero
    # column region [W, Wp); the im2col prefix slice requires Wm <= Wp.
    assert Wp >= W + pw and Wm <= Wp

    # Fold all KH*KW taps into one contraction when Cin is small (per-tap K=Cin dots
    # waste >95% of the MXU there); otherwise fold only KW and loop over KH.
    M = Hout * Wm
    fold_kh = (Cin < 128) and (M * KH * KW * Cin * 2 <= (8 << 20))

    # ---- one-time parameter prep (plain JAX, O(KH*KW*Cin*Cout)) ----
    scale = jnp.exp(logs.astype(jnp.float32) * logscale_factor)             # (Cout,)
    w_hwio = jnp.transpose(weight_oihw, (2, 3, 1, 0)).astype(jnp.float32)   # OIHW->HWIO
    w_scaled = w_hwio * scale                                               # fold exp-scale
    w_pad = jnp.zeros((KH, KW, Cin, Cout_pad), jnp.float32).at[..., :Cout].set(w_scaled)
    w_pad = w_pad.astype(compute_dtype)
    if fold_kh:
        Kfold = KH * KW * Cin
        w_k = w_pad.reshape(1, Kfold, Cout_pad)        # K index = (kh*KW + kw)*Cin + cin
        xim_rows = Hout
    else:
        Kfold = KW * Cin
        w_k = w_pad.reshape(KH, Kfold, Cout_pad)       # K index = kw*Cin + cin
        xim_rows = Hp
    if bias is None:
        bias = jnp.zeros((Cout,), jnp.float32)
    b_pad = jnp.zeros((1, Cout_pad), jnp.float32).at[0, :Cout].set(
        bias.astype(jnp.float32) * scale)

    # Activation layout: NCHW -> NHWC once at the module boundary (channels on lanes).
    x_nhwc = jnp.transpose(x_nchw, (0, 2, 3, 1))

    kernel = functools.partial(
        _conv2dzero_kernel, KH=KH, KW=KW, ph=ph, pw=pw,
        fold_kh=fold_kh, compute_dtype=compute_dtype)

    out_nhwc = pl.pallas_call(
        kernel,
        # Padded width / Cout are emitted to HBM (lane-dense, relayout-free stores) and
        # sliced away in the wrapper.
        out_shape=jax.ShapeDtypeStruct((N, Hout, Wm, Cout_pad), x_nchw.dtype),
        grid=(N, n_co),
        in_specs=[
            pl.BlockSpec((1, H, W, Cin), lambda n, co: (n, 0, 0, 0)),
            pl.BlockSpec((w_k.shape[0], Kfold, co_tile), lambda n, co: (0, 0, co)),
            pl.BlockSpec((1, co_tile), lambda n, co: (0, co)),
        ],
        out_specs=pl.BlockSpec((1, Hout, Wm, co_tile), lambda n, co: (n, 0, 0, co)),
        scratch_shapes=[
            pltpu.VMEM((Hp, Wp, Cin), jnp.float32),            # zero-padded input plane
            pltpu.VMEM((xim_rows, Wm, Kfold), compute_dtype),  # bf16 im2col slab
        ],
        compiler_params=pltpu.CompilerParams(
            dimension_semantics=("parallel", "arbitrary"),
            vmem_limit_bytes=vmem_limit,
        ),
    )(x_nhwc, w_k, b_pad)

    out = out_nhwc[:, :, :Wout, :Cout]             # drop width / lane padding
    return jnp.transpose(out, (0, 3, 1, 2))        # NHWC -> NCHW


if __name__ == "__main__":
    key = jax.random.PRNGKey(0)
    k1, k2, k3, k4 = jax.random.split(key, 4)

    def ref_conv2dzero(x, w, b, lg):
        r = jax.lax.conv_general_dilated(
            x, w, window_strides=(1, 1), padding=((1, 1), (1, 1)),
            dimension_numbers=("NCHW", "OIHW", "NCHW"))
        r = r + b.reshape(1, -1, 1, 1)
        return r * jnp.exp(lg * LOGSCALE_FACTOR).reshape(1, -1, 1, 1)

    # --- primary test: small Cin -> full tap folding (single MXU dot per co tile) ---
    N, Cin, H, W = 2, 4, 16, 16
    Cout = 8
    x = jax.random.normal(k1, (N, Cin, H, W), jnp.float32)
    # NOTE: the module zero-inits weight/bias/logs (output would be trivially zero).
    # Use small deterministic values so the forward pass is actually exercised.
    weight = 0.05 * jax.random.normal(k2, (Cout, Cin, 3, 3), jnp.float32)
    bias = 0.1 * jax.random.normal(k3, (Cout,), jnp.float32)
    logs = 0.1 * jax.random.normal(k4, (Cout,), jnp.float32)

    out = jax.block_until_ready(conv2d_zero(x, weight, bias, logs))
    ref = ref_conv2dzero(x, weight, bias, logs)
    assert out.shape == (N, Cout, H, W)
    # bf16 MXU operands with f32 accumulation: compare at bf16-level tolerance.
    assert jnp.allclose(out, ref, atol=3e-2, rtol=3e-2), "mismatch vs reference (fold_kh)"

    # --- secondary test: large Cin -> KW-folded path (KH loop-carried dots) ---
    N2, Cin2, H2, W2, Cout2 = 1, 128, 8, 8, 16
    x2 = jax.random.normal(k1, (N2, Cin2, H2, W2), jnp.float32)
    w2 = 0.02 * jax.random.normal(k2, (Cout2, Cin2, 3, 3), jnp.float32)
    b2 = 0.1 * jax.random.normal(k3, (Cout2,), jnp.float32)
    l2 = 0.1 * jax.random.normal(k4, (Cout2,), jnp.float32)
    out2 = jax.block_until_ready(conv2d_zero(x2, w2, b2, l2))
    ref2 = ref_conv2dzero(x2, w2, b2, l2)
    assert out2.shape == (N2, Cout2, H2, W2)
    assert jnp.allclose(out2, ref2, atol=5e-2, rtol=5e-2), "mismatch vs reference (kw-fold)"

    print("KERNEL_OK")
</pallas_src>

<mosaic_0001>
module attributes {stable_mosaic.version = 11 : i64} {
  func.func @_conv2dzero_kernel(%arg0: i32, %arg1: i32, %arg2: memref<1x16x16x4xf32, #tpu.memory_space<vmem>>, %arg3: memref<1x36x128xbf16, #tpu.memory_space<vmem>>, %arg4: memref<1x128xf32, #tpu.memory_space<vmem>>, %arg5: memref<1x16x16x128xf32, #tpu.memory_space<vmem>>, %arg6: memref<18x32x4xf32, #tpu.memory_space<vmem>>, %arg7: memref<16x16x36xbf16, #tpu.memory_space<vmem>>) attributes {dimension_semantics = [#tpu.dimension_semantics<parallel>, #tpu.dimension_semantics<arbitrary>], iteration_bounds = array<i64: 2, 1>, scalar_prefetch = 0 : i64, scratch_operands = 2 : i64, tpu.core_type = #tpu.core_type<tc>, window_params = [{transform_indices = @transform_0, window_bounds = array<i64: 1, 16, 16, 4>}, {transform_indices = @transform_1, window_bounds = array<i64: 1, 36, 128>}, {transform_indices = @transform_2, window_bounds = array<i64: 1, 128>}, {transform_indices = @transform_3, window_bounds = array<i64: 1, 16, 16, 128>}]} {
    %c0_i32 = arith.constant 0 : i32
    %0 = arith.cmpi eq, %arg1, %c0_i32 : i32
    %1 = arith.extui %0 : i1 to i32
    %c0_i32_0 = arith.constant 0 : i32
    %2 = arith.cmpi ne, %1, %c0_i32_0 : i32
    scf.if %2 {
      %cst_12 = arith.constant 0.000000e+00 : f32
      %16 = vector.broadcast %cst_12 : f32 to vector<1x32x4xf32>
      %c0_13 = arith.constant 0 : index
      %c0_14 = arith.constant 0 : index
      %c0_15 = arith.constant 0 : index
      %17 = vector.load %arg6[%c0_13, %c0_14, %c0_15] : memref<18x32x4xf32, #tpu.memory_space<vmem>>, vector<1x32x4xf32>
      tpu.vector_store %arg6[%c0_13, %c0_14, %c0_15], %16 {strides = array<i32>} : memref<18x32x4xf32, #tpu.memory_space<vmem>>, vector<1x32x4xf32>,
      %cst_16 = arith.constant 0.000000e+00 : f32
      %18 = vector.broadcast %cst_16 : f32 to vector<1x32x4xf32>
      %c17 = arith.constant 17 : index
      %c0_17 = arith.constant 0 : index
      %c0_18 = arith.constant 0 : index
      %19 = vector.load %arg6[%c17, %c0_17, %c0_18] : memref<18x32x4xf32, #tpu.memory_space<vmem>>, vector<1x32x4xf32>
      tpu.vector_store %arg6[%c17, %c0_17, %c0_18], %18 {strides = array<i32>} : memref<18x32x4xf32, #tpu.memory_space<vmem>>, vector<1x32x4xf32>,
      %cst_19 = arith.constant 0.000000e+00 : f32
      %20 = vector.broadcast %cst_19 : f32 to vector<18x16x4xf32>
      %c0_20 = arith.constant 0 : index
      %c16 = arith.constant 16 : index
      %c0_21 = arith.constant 0 : index
      %21 = vector.load %arg6[%c0_20, %c16, %c0_21] : memref<18x32x4xf32, #tpu.memory_space<vmem>>, vector<18x16x4xf32>
      tpu.vector_store %arg6[%c0_20, %c16, %c0_21], %20 {strides = array<i32>} : memref<18x32x4xf32, #tpu.memory_space<vmem>>, vector<18x16x4xf32>,
      %c0_22 = arith.constant 0 : index
      %c0_23 = arith.constant 0 : index
      %c0_24 = arith.constant 0 : index
      %c0_25 = arith.constant 0 : index
      %22 = vector.load %arg2[%c0_22, %c0_23, %c0_24, %c0_25] : memref<1x16x16x4xf32, #tpu.memory_space<vmem>>, vector<1x16x16x4xf32>
      %23 = vector.shape_cast %22 : vector<1x16x16x4xf32> to vector<16x16x4xf32>
      %c1 = arith.constant 1 : index
      %c0_26 = arith.constant 0 : index
      %c0_27 = arith.constant 0 : index
      %24 = vector.load %arg6[%c1, %c0_26, %c0_27] : memref<18x32x4xf32, #tpu.memory_space<vmem>>, vector<16x16x4xf32>
      tpu.vector_store %arg6[%c1, %c0_26, %c0_27], %23 {strides = array<i32>} : memref<18x32x4xf32, #tpu.memory_space<vmem>>, vector<16x16x4xf32>,
      %c0_28 = arith.constant 0 : index
      %c0_29 = arith.constant 0 : index
      %c0_30 = arith.constant 0 : index
      %25 = vector.load %arg6[%c0_28, %c0_29, %c0_30] : memref<18x32x4xf32, #tpu.memory_space<vmem>>, vector<18x32x4xf32>
      %c1_i32 = arith.constant 1 : i32
      %26 = tpu.dynamic_rotate %25 by %c1_i32 dim 1 : vector<18x32x4xf32>, i32 -> vector<18x32x4xf32>
      %27 = arith.truncf %26 : vector<18x32x4xf32> to vector<18x32x4xbf16>
      %28 = vector.extract_strided_slice %27 {offsets = [0, 0, 0], sizes = [16, 16, 4], strides = [1, 1, 1]} : vector<18x32x4xbf16> to vector<16x16x4xbf16>
      %c0_31 = arith.constant 0 : index
      %c0_32 = arith.constant 0 : index
      %c0_33 = arith.constant 0 : index
      %29 = vector.load %arg7[%c0_31, %c0_32, %c0_33] : memref<16x16x36xbf16, #tpu.memory_space<vmem>>, vector<16x16x4xbf16>
      tpu.vector_store %arg7[%c0_31, %c0_32, %c0_33], %28 {strides = array<i32>} : memref<16x16x36xbf16, #tpu.memory_space<vmem>>, vector<16x16x4xbf16>,
      %30 = vector.extract_strided_slice %27 {offsets = [1, 0, 0], sizes = [16, 16, 4], strides = [1, 1, 1]} : vector<18x32x4xbf16> to vector<16x16x4xbf16>
      %c0_34 = arith.constant 0 : index
      %c0_35 = arith.constant 0 : index
      %c12 = arith.constant 12 : index
      %31 = vector.load %arg7[%c0_34, %c0_35, %c12] : memref<16x16x36xbf16, #tpu.memory_space<vmem>>, vector<16x16x4xbf16>
      tpu.vector_store %arg7[%c0_34, %c0_35, %c12], %30 {strides = array<i32>} : memref<16x16x36xbf16, #tpu.memory_space<vmem>>, vector<16x16x4xbf16>,
      %32 = vector.extract_strided_slice %27 {offsets = [2, 0, 0], sizes = [16, 16, 4], strides = [1, 1, 1]} : vector<18x32x4xbf16> to vector<16x16x4xbf16>
      %c0_36 = arith.constant 0 : index
      %c0_37 = arith.constant 0 : index
      %c24 = arith.constant 24 : index
      %33 = vector.load %arg7[%c0_36, %c0_37, %c24] : memref<16x16x36xbf16, #tpu.memory_space<vmem>>, vector<16x16x4xbf16>
      tpu.vector_store %arg7[%c0_36, %c0_37, %c24], %32 {strides = array<i32>} : memref<16x16x36xbf16, #tpu.memory_space<vmem>>, vector<16x16x4xbf16>,
      %34 = arith.truncf %25 : vector<18x32x4xf32> to vector<18x32x4xbf16>
      %35 = vector.extract_strided_slice %34 {offsets = [0, 0, 0], sizes = [16, 16, 4], strides = [1, 1, 1]} : vector<18x32x4xbf16> to vector<16x16x4xbf16>
      %c0_38 = arith.constant 0 : index
      %c0_39 = arith.constant 0 : index
      %c4 = arith.constant 4 : index
      %36 = vector.load %arg7[%c0_38, %c0_39, %c4] : memref<16x16x36xbf16, #tpu.memory_space<vmem>>, vector<16x16x4xbf16>
      tpu.vector_store %arg7[%c0_38, %c0_39, %c4], %35 {strides = array<i32>} : memref<16x16x36xbf16, #tpu.memory_space<vmem>>, vector<16x16x4xbf16>,
      %37 = vector.extract_strided_slice %34 {offsets = [1, 0, 0], sizes = [16, 16, 4], strides = [1, 1, 1]} : vector<18x32x4xbf16> to vector<16x16x4xbf16>
      %c0_40 = arith.constant 0 : index
      %c0_41 = arith.constant 0 : index
      %c16_42 = arith.constant 16 : index
      %38 = vector.load %arg7[%c0_40, %c0_41, %c16_42] : memref<16x16x36xbf16, #tpu.memory_space<vmem>>, vector<16x16x4xbf16>
      tpu.vector_store %arg7[%c0_40, %c0_41, %c16_42], %37 {strides = array<i32>} : memref<16x16x36xbf16, #tpu.memory_space<vmem>>, vector<16x16x4xbf16>,
      %39 = vector.extract_strided_slice %34 {offsets = [2, 0, 0], sizes = [16, 16, 4], strides = [1, 1, 1]} : vector<18x32x4xbf16> to vector<16x16x4xbf16>
      %c0_43 = arith.constant 0 : index
      %c0_44 = arith.constant 0 : index
      %c28 = arith.constant 28 : index
      %40 = vector.load %arg7[%c0_43, %c0_44, %c28] : memref<16x16x36xbf16, #tpu.memory_space<vmem>>, vector<16x16x4xbf16>
      tpu.vector_store %arg7[%c0_43, %c0_44, %c28], %39 {strides = array<i32>} : memref<16x16x36xbf16, #tpu.memory_space<vmem>>, vector<16x16x4xbf16>,
      %c31_i32 = arith.constant 31 : i32
      %41 = tpu.dynamic_rotate %25 by %c31_i32 dim 1 : vector<18x32x4xf32>, i32 -> vector<18x32x4xf32>
      %42 = arith.truncf %41 : vector<18x32x4xf32> to vector<18x32x4xbf16>
      %43 = vector.extract_strided_slice %42 {offsets = [0, 0, 0], sizes = [16, 16, 4], strides = [1, 1, 1]} : vector<18x32x4xbf16> to vector<16x16x4xbf16>
      %c0_45 = arith.constant 0 : index
      %c0_46 = arith.constant 0 : index
      %c8 = arith.constant 8 : index
      %44 = vector.load %arg7[%c0_45, %c0_46, %c8] : memref<16x16x36xbf16, #tpu.memory_space<vmem>>, vector<16x16x4xbf16>
      tpu.vector_store %arg7[%c0_45, %c0_46, %c8], %43 {strides = array<i32>} : memref<16x16x36xbf16, #tpu.memory_space<vmem>>, vector<16x16x4xbf16>,
      %45 = vector.extract_strided_slice %42 {offsets = [1, 0, 0], sizes = [16, 16, 4], strides = [1, 1, 1]} : vector<18x32x4xbf16> to vector<16x16x4xbf16>
      %c0_47 = arith.constant 0 : index
      %c0_48 = arith.constant 0 : index
      %c20 = arith.constant 20 : index
      %46 = vector.load %arg7[%c0_47, %c0_48, %c20] : memref<16x16x36xbf16, #tpu.memory_space<vmem>>, vector<16x16x4xbf16>
      tpu.vector_store %arg7[%c0_47, %c0_48, %c20], %45 {strides = array<i32>} : memref<16x16x36xbf16, #tpu.memory_space<vmem>>, vector<16x16x4xbf16>,
      %47 = vector.extract_strided_slice %42 {offsets = [2, 0, 0], sizes = [16, 16, 4], strides = [1, 1, 1]} : vector<18x32x4xbf16> to vector<16x16x4xbf16>
      %c0_49 = arith.constant 0 : index
      %c0_50 = arith.constant 0 : index
      %c32 = arith.constant 32 : index
      %48 = vector.load %arg7[%c0_49, %c0_50, %c32] : memref<16x16x36xbf16, #tpu.memory_space<vmem>>, vector<16x16x4xbf16>
      tpu.vector_store %arg7[%c0_49, %c0_50, %c32], %47 {strides = array<i32>} : memref<16x16x36xbf16, #tpu.memory_space<vmem>>, vector<16x16x4xbf16>,
    } else {
    }
    %c0 = arith.constant 0 : index
    %c0_1 = arith.constant 0 : index
    %c0_2 = arith.constant 0 : index
    %3 = vector.load %arg7[%c0, %c0_1, %c0_2] : memref<16x16x36xbf16, #tpu.memory_space<vmem>>, vector<16x16x36xbf16>
    %4 = vector.shape_cast %3 : vector<16x16x36xbf16> to vector<256x36xbf16>
    %c0_3 = arith.constant 0 : index
    %c0_4 = arith.constant 0 : index
    %c0_5 = arith.constant 0 : index
    %5 = vector.load %arg3[%c0_3, %c0_4, %c0_5] : memref<1x36x128xbf16, #tpu.memory_space<vmem>>, vector<1x36x128xbf16>
    %6 = vector.shape_cast %5 : vector<1x36x128xbf16> to vector<36x128xbf16>
    %cst = arith.constant dense<0.000000e+00> : vector<256x128xf32>
    %7 = tpu.matmul %4, %6, %cst {dimension_numbers = #tpu.dot_dimension_numbers<[1], [0], [0], [1], [0, 0, 1, 1], [], []>} : vector<256x36xbf16>, vector<36x128xbf16>, vector<256x128xf32> -> vector<256x128xf32>
    %8 = vector.shape_cast %7 : vector<256x128xf32> to vector<16x16x128xf32>
    %c0_6 = arith.constant 0 : index
    %c0_7 = arith.constant 0 : index
    %9 = vector.load %arg4[%c0_6, %c0_7] : memref<1x128xf32, #tpu.memory_space<vmem>>, vector<1x128xf32>
    %10 = vector.shape_cast %9 : vector<1x128xf32> to vector<1x1x128xf32>
    %11 = vector.broadcast %10 : vector<1x1x128xf32> to vector<16x16x128xf32>
    %12 = arith.addf %8, %11 : vector<16x16x128xf32>
    %c0_8 = arith.constant 0 : index
    %c0_9 = arith.constant 0 : index
    %c0_10 = arith.constant 0 : index
    %c0_11 = arith.constant 0 : index
    %13 = vector.load %arg5[%c0_8, %c0_9, %c0_10, %c0_11] : memref<1x16x16x128xf32, #tpu.memory_space<vmem>>, vector<1x16x16x128xf32>
    %14 = vector.shape_cast %13 : vector<1x16x16x128xf32> to vector<16x16x128xf32>
    %15 = vector.shape_cast %12 : vector<16x16x128xf32> to vector<1x16x16x128xf32>
    tpu.vector_store %arg5[%c0_8, %c0_9, %c0_10, %c0_11], %15 {strides = array<i32>} : memref<1x16x16x128xf32, #tpu.memory_space<vmem>>, vector<1x16x16x128xf32>,
    return
  }
  func.func @transform_0(%arg0: i32, %arg1: i32) -> (i32, i32, i32, i32) {
    %c0_i32 = arith.constant 0 : i32
    %c0_i32_0 = arith.constant 0 : i32
    %c0_i32_1 = arith.constant 0 : i32
    %c0_i32_2 = arith.constant 0 : i32
    return %arg0, %c0_i32, %c0_i32_0, %c0_i32_1 : i32, i32, i32, i32
  }
  func.func @transform_1(%arg0: i32, %arg1: i32) -> (i32, i32, i32) {
    %c0_i32 = arith.constant 0 : i32
    %c0_i32_0 = arith.constant 0 : i32
    %c0_i32_1 = arith.constant 0 : i32
    return %c0_i32, %c0_i32_0, %arg1 : i32, i32, i32
  }
  func.func @transform_2(%arg0: i32, %arg1: i32) -> (i32, i32) {
    %c0_i32 = arith.constant 0 : i32
    %c0_i32_0 = arith.constant 0 : i32
    return %c0_i32, %arg1 : i32, i32
  }
  func.func @transform_3(%arg0: i32, %arg1: i32) -> (i32, i32, i32, i32) {
    %c0_i32 = arith.constant 0 : i32
    %c0_i32_0 = arith.constant 0 : i32
    %c0_i32_1 = arith.constant 0 : i32
    return %arg0, %c0_i32, %c0_i32_0, %arg1 : i32, i32, i32, i32
  }
}

</mosaic_0001>

<llo_original>
// kernel: tpu_custom_call.1
$region0: #{tpu_custom_call.1}
  #allocation0 [shape = 'u32[]', space=smem, size = 0x4, offset = 0x4, fixed_abs, tag = 'smem constant byte address 0x4 - core index']
  #allocation1 [shape = 'u32[72,128]{1,0:T(1,128)}', space=vmem, size = 0x9000, scoped, tag = 'internal scratch']
  #allocation2 [shape = 'f32[18,32,4]{2,1,0:T(8,128)}', space=vmem, size = 0x48000, scoped, tag = 'scratch operand']
  #allocation3 [shape = 'bf16[16,16,36]{2,1,0:T(8,128)(2,1)}', space=vmem, size = 0x10000, scoped, tag = 'scratch operand']
  %s0 = inlined_call_operand.vmem [shape: f32[2,16,16,4], index: 0, kind: input, shape index: {}]
  %s1 = inlined_call_operand.vmem [shape: bf16[1,36,128], index: 1, kind: input, shape index: {}]
  %s2 = inlined_call_operand.vmem [shape: f32[1,128], index: 2, kind: input, shape index: {}]
  %s3 = inlined_call_operand.hbm [shape: f32[2,16,16,128], index: 3, kind: output, shape index: {}]
  %s4 = sld [smem:[#allocation0]]
  $region49: #{tpu_custom_call.1} parent=0
    _
  %s6 = ssub.s32 1, %s4
  %s7 = scalar_select 0, %s6, %s4
  $region1: #{tpu_custom_call.1} parent=0
    #allocation4 [shape = 'u8[262144]{0}', space=vmem, size = 0x40000, scoped, tag = 'output window, operand 0']
    #allocation5 [shape = 's32[2]{0}', space=sflag, size = 0x8, scoped, tag = 'scoped memory for tpu_custom_call.1']
    %8 = vsyncpa [#allocation5], 0
    %s9 = scalar_lea.sflag [#allocation5], 1
    %10 = vsyncpa %s9, 0
    loop: start=0, step=1, limit=4
    $region2: #{tpu_custom_call.1} parent=1 // loop_pre_header
      _
    $region3: #{tpu_custom_call.1} parent=1 // loop_header
      %s12 = sphi 0, %s16
      %p13 = scmp.ge.s32.totalorder %s12, 4
      %s19 = sphi 0, %s31
      %s20 = sphi 0, %s27
      %s21 = sphi 0, %s19
      %s22 = sphi 0, %s20
      %s23 = sphi 0, %s21
      %s24 = sphi 0, %s22
      %s34 = sphi 0, %s36
      %s37 = sphi 0, %s34
      %s38 = sphi 0, %s37
      %s54 = sphi 0, %s38
      %s60 = sphi 0, %s62
      %s63 = sphi 0, %s60
      %s64 = sphi 0, %s63
      %s80 = sphi 0, %s64
      %s86 = sphi 0, %s88
      %s89 = sphi 0, %s86
      %s90 = sphi 0, %s89
      %s106 = sphi 0, %s90
      %s114 = sphi 0, %s116
      %s117 = sphi 0, %s114
      %s118 = sphi 0, %s117
      %s134 = sphi 0, %s118
    $region4: #{tpu_custom_call.1} parent=1 // loop_header_branch
      %15 = sbr.rel (%p13) target = $region8
    $region5: #{tpu_custom_call.1} parent=1 // loop_body
      %s17 = ssub.s32 %s12, 1
      %s18 = ssub.s32 %s12, 2
      %s25 = sadd.s32 1, %s20
      %p26 = scmp.ge.s32.totalorder %s25, 1
      %s27 = scalar_select %p26, 0, %s25
      %s28 = sadd.s32 1, %s19
      %s29 = scalar_select %p26, %s28, %s19
      %p30 = scmp.ge.s32.totalorder %s29, 2
      %s31 = scalar_select %p30, 0, %s29
      %s32 = ssub.s32 %s19, %s31
      %p33 = scmp.eq.s32.totalorder %s32, 0
      %s35 = sadd.s32 %s34, 1
      %s36 = scalar_select %p33, %s34, %s35
      %p39 = pneg %p33
      %p40 = scmp.eq.s32.totalorder %s12, 1
      %p41 = por %p39, %p40
      %p42 = scmp.ne.s32.totalorder %s34, %s37
      %p43 = scmp.eq.s32.totalorder %s12, 0
      %p44 = por %p42, %p43
      %p45 = scmp.ne.s32.totalorder %s34, %s37
      %p46 = scmp.eq.s32.totalorder %s17, 1
      %p47 = por %p45, %p46
      %p48 = scmp.ne.s32.totalorder %s37, %s38
      %p49 = scmp.eq.s32.totalorder %s17, 0
      %p50 = por %p48, %p49
      %p51 = scmp.ne.s32.totalorder %s37, %s38
      %p52 = scmp.eq.s32.totalorder %s18, 1
      %p53 = por %p51, %p52
      %p55 = scmp.ne.s32.totalorder %s38, %s54
      %p56 = scmp.eq.s32.totalorder %s18, 0
      %p57 = por %p55, %p56
      %s58 = ssub.s32 %s20, %s27
      %p59 = scmp.eq.s32.totalorder %s58, 0
      %s61 = sadd.s32 %s60, 1
      %s62 = scalar_select %p59, %s60, %s61
      %p65 = pneg %p59
      %p66 = scmp.eq.s32.totalorder %s12, 1
      %p67 = por %p65, %p66
      %p68 = scmp.ne.s32.totalorder %s60, %s63
      %p69 = scmp.eq.s32.totalorder %s12, 0
      %p70 = por %p68, %p69
      %p71 = scmp.ne.s32.totalorder %s60, %s63
      %p72 = scmp.eq.s32.totalorder %s17, 1
      %p73 = por %p71, %p72
      %p74 = scmp.ne.s32.totalorder %s63, %s64
      %p75 = scmp.eq.s32.totalorder %s17, 0
      %p76 = por %p74, %p75
      %p77 = scmp.ne.s32.totalorder %s63, %s64
      %p78 = scmp.eq.s32.totalorder %s18, 1
      %p79 = por %p77, %p78
      %p81 = scmp.ne.s32.totalorder %s64, %s80
      %p82 = scmp.eq.s32.totalorder %s18, 0
      %p83 = por %p81, %p82
      %s84 = ssub.s32 %s20, %s27
      %p85 = scmp.eq.s32.totalorder %s84, 0
      %s87 = sadd.s32 %s86, 1
      %s88 = scalar_select %p85, %s86, %s87
      %p91 = pneg %p85
      %p92 = scmp.eq.s32.totalorder %s12, 1
      %p93 = por %p91, %p92
      %p94 = scmp.ne.s32.totalorder %s86, %s89
      %p95 = scmp.eq.s32.totalorder %s12, 0
      %p96 = por %p94, %p95
      %p97 = scmp.ne.s32.totalorder %s86, %s89
      %p98 = scmp.eq.s32.totalorder %s17, 1
      %p99 = por %p97, %p98
      %p100 = scmp.ne.s32.totalorder %s89, %s90
      %p101 = scmp.eq.s32.totalorder %s17, 0
      %p102 = por %p100, %p101
      %p103 = scmp.ne.s32.totalorder %s89, %s90
      %p104 = scmp.eq.s32.totalorder %s18, 1
      %p105 = por %p103, %p104
      %p107 = scmp.ne.s32.totalorder %s90, %s106
      %p108 = scmp.eq.s32.totalorder %s18, 0
      %p109 = por %p107, %p108
      %s110 = ssub.s32 %s19, %s31
      %s111 = ssub.s32 %s20, %s27
      %s112 = sor.u32 %s110, %s111
      %p113 = scmp.eq.s32.totalorder %s112, 0
      %s115 = sadd.s32 %s114, 1
      %s116 = scalar_select %p113, %s114, %s115
      %p119 = pneg %p113
      %p120 = scmp.eq.s32.totalorder %s12, 1
      %p121 = por %p119, %p120
      %p122 = scmp.ne.s32.totalorder %s114, %s117
      %p123 = scmp.eq.s32.totalorder %s12, 0
      %p124 = por %p122, %p123
      %p125 = scmp.ne.s32.totalorder %s114, %s117
      %p126 = scmp.eq.s32.totalorder %s17, 1
      %p127 = por %p125, %p126
      %p128 = scmp.ne.s32.totalorder %s117, %s118
      %p129 = scmp.eq.s32.totalorder %s17, 0
      %p130 = por %p128, %p129
      %p131 = scmp.ne.s32.totalorder %s117, %s118
      %p132 = scmp.eq.s32.totalorder %s18, 1
      %p133 = por %p131, %p132
      %p135 = scmp.ne.s32.totalorder %s118, %s134
      %p136 = scmp.eq.s32.totalorder %s18, 0
      %p137 = por %p135, %p136
      %p138 = scmp.le.s32.totalorder 1, %s12
      %p139 = scmp.lt.s32.totalorder %s12, 3
      %p140 = pnand %p138, %p139
      %p141 = pneg %p140
      // Predicated region
      $region9: #{tpu_custom_call.1} parent=5 // pred_check
        _
      $region10: #{tpu_custom_call.1} parent=5 // pred_check_branch
        %143 = sbr.rel (%p140) target = $region12
      $region11: #{tpu_custom_call.1} parent=5 // pred_region
        %s144 = ssub.s32 %s12, 1
        // Predicated region
        $region13: #{tpu_custom_call.1} parent=11 // pred_check
          %p145 = pneg %p76
        $region14: #{tpu_custom_call.1} parent=11 // pred_check_branch
          %147 = sbr.rel (%p145) target = $region16
        $region15: #{tpu_custom_call.1} parent=11 // pred_region
          %p148 = scmp.lt.s32.totalorder %s22, 0
          %s149 = scalar_select %p148, %s22, 0
          %s150 = smul.addr %s149, 4
          %s151 = scalar_lea.vmem %s1, %s150
        $region16: #{tpu_custom_call.1} parent=11 // pred_fallthru
          _
        // Predicated region
        $region17: #{tpu_custom_call.1} parent=11 // pred_check
          %p152 = pneg %p102
        $region18: #{tpu_custom_call.1} parent=11 // pred_check_branch
          %154 = sbr.rel (%p152) target = $region20
        $region19: #{tpu_custom_call.1} parent=11 // pred_region
          %p155 = scmp.lt.s32.totalorder %s22, 0
          %s156 = scalar_select %p155, %s22, 0
          %s157 = scalar_lea.vmem %s2, %s156
        $region20: #{tpu_custom_call.1} parent=11 // pred_fallthru
          _
      $region12: #{tpu_custom_call.1} parent=5 // pred_fallthru
        _
      %p158 = scmp.lt.s32.totalorder %s12, 2
      // Predicated region
      $region21: #{tpu_custom_call.1} parent=5 // pred_check
        %p159 = pneg %p158
      $region22: #{tpu_custom_call.1} parent=5 // pred_check_branch
        %161 = sbr.rel (%p159) target = $region24
      $region23: #{tpu_custom_call.1} parent=5 // pred_region
        // Predicated region
        $region25: #{tpu_custom_call.1} parent=23 // pred_check
          %p162 = pneg %p44
        $region26: #{tpu_custom_call.1} parent=23 // pred_check_branch
          %164 = sbr.rel (%p162) target = $region28
        $region27: #{tpu_custom_call.1} parent=23 // pred_region
          %p165 = scmp.lt.s32.totalorder %s19, 1
          %s166 = scalar_select %p165, %s19, 1
          %s167 = smul.addr %s166, 32
          %s168 = smul.addr %s167, 8
          %s169 = scalar_lea.vmem %s0, %s168
        $region28: #{tpu_custom_call.1} parent=23 // pred_fallthru
          _
      $region24: #{tpu_custom_call.1} parent=5 // pred_fallthru
        _
      %p170 = scmp.le.s32.totalorder 1, %s12
      %p171 = scmp.lt.s32.totalorder %s12, 3
      %p172 = pnand %p170, %p171
      %p173 = pneg %p172
      // Predicated region
      $region29: #{tpu_custom_call.1} parent=5 // pred_check
        _
      $region30: #{tpu_custom_call.1} parent=5 // pred_check_branch
        %175 = sbr.rel (%p172) target = $region32
      $region31: #{tpu_custom_call.1} parent=5 // pred_region
        %s176 = ssub.s32 %s12, 1
        %p177 = scmp.lt.s32.totalorder %s21, 1
        %s178 = scalar_select %p177, %s21, 1
        %s179 = smul.addr %s178, 32
        %s180 = smul.addr %s179, 8
        %s181 = scalar_lea.vmem %s0, %s180
        %p182 = pneg %p50
        %p183 = pneg %p47
        %p184 = scmp.lt.s32.totalorder %s22, 0
        %s185 = scalar_select %p184, %s22, 0
        %s186 = smul.addr %s185, 4
        %s187 = scalar_lea.vmem %s1, %s186
        %p188 = pneg %p76
        %p189 = pneg %p73
        %p190 = scmp.lt.s32.totalorder %s22, 0
        %s191 = scalar_select %p190, %s22, 0
        %s192 = scalar_lea.vmem %s2, %s191
        %p193 = pneg %p102
        %p194 = pneg %p99
        %p195 = pneg %p130
        %p196 = pneg %p127
        %s197 = sand.u32 %s117, 1
        %s198 = scalar_lea.sflag [#allocation5], %s197
        %s199 = sand.u32 %s117, 1
        %s200 = smul.addr %s199, 256
        %s201 = scalar_lea.vmem [#allocation4], %s200
        %p202 = scmp.lt.s32.totalorder %s21, 1
        %s203 = scalar_select %p202, %s21, 1
        %s204 = smul.addr %s203, 32
        %s205 = smul.addr %s204, 8
        %s206 = scalar_lea.vmem %s0, %s205
        %p207 = scmp.lt.s32.totalorder %s22, 0
        %s208 = scalar_select %p207, %s22, 0
        %s209 = smul.addr %s208, 4
        %s210 = scalar_lea.vmem %s1, %s209
        %p211 = scmp.lt.s32.totalorder %s22, 0
        %s212 = scalar_select %p211, %s22, 0
        %s213 = scalar_lea.vmem %s2, %s212
        %p215 = scmp.eq.s32.totalorder %s22, 0
        // Predicated region
        $region33: #{tpu_custom_call.1} parent=31 // pred_check
          %p216 = pneg %p215
        $region34: #{tpu_custom_call.1} parent=31 // pred_check_branch
          %218 = sbr.rel (%p216) target = $region36
        $region35: #{tpu_custom_call.1} parent=31 // pred_region
          %vm219 = vcmask 31744
          %220 = vst.msk [vmem:[#allocation2] sm:$0xff] %vm219, 0.0
          %221 = vst.msk [vmem:[#allocation2 + $0x8] sm:$0xff] %vm219, 0.0
          %222 = vst.msk [vmem:[#allocation2 + $0x10] sm:$0xff] %vm219, 0.0
          %223 = vst.msk [vmem:[#allocation2 + $0x18] sm:$0xff] %vm219, 0.0
          %s224 = scalar_lea.vmem [#allocation2], 544
          %225 = vst.msk [vmem:[%s224] sm:$0xff] %vm219, 0.0
          %226 = vst.msk [vmem:[%s224 + $0x8] sm:$0xff] %vm219, 0.0
          %227 = vst.msk [vmem:[%s224 + $0x10] sm:$0xff] %vm219, 0.0
          %228 = vst.msk [vmem:[%s224 + $0x18] sm:$0xff] %vm219, 0.0
          %229 = vst.msk [vmem:[#allocation2 + $0x10] sm:$0xff] %vm219, 0.0
          %230 = vst.msk [vmem:[#allocation2 + $0x18] sm:$0xff] %vm219, 0.0
          %231 = vst.msk [vmem:[#allocation2 + $0x30] sm:$0xff] %vm219, 0.0
          %232 = vst.msk [vmem:[#allocation2 + $0x38] sm:$0xff] %vm219, 0.0
          %233 = vst.msk [vmem:[#allocation2 + $0x50] sm:$0xff] %vm219, 0.0
          %234 = vst.msk [vmem:[#allocation2 + $0x58] sm:$0xff] %vm219, 0.0
          %235 = vst.msk [vmem:[#allocation2 + $0x70] sm:$0xff] %vm219, 0.0
          %236 = vst.msk [vmem:[#allocation2 + $0x78] sm:$0xff] %vm219, 0.0
          %237 = vst.msk [vmem:[#allocation2 + $0x90] sm:$0xff] %vm219, 0.0
          %238 = vst.msk [vmem:[#allocation2 + $0x98] sm:$0xff] %vm219, 0.0
          %239 = vst.msk [vmem:[#allocation2 + $0xb0] sm:$0xff] %vm219, 0.0
          %240 = vst.msk [vmem:[#allocation2 + $0xb8] sm:$0xff] %vm219, 0.0
          %241 = vst.msk [vmem:[#allocation2 + $0xd0] sm:$0xff] %vm219, 0.0
          %242 = vst.msk [vmem:[#allocation2 + $0xd8] sm:$0xff] %vm219, 0.0
          %243 = vst.msk [vmem:[#allocation2 + $0xf0] sm:$0xff] %vm219, 0.0
          %244 = vst.msk [vmem:[#allocation2 + $0xf8] sm:$0xff] %vm219, 0.0
          %245 = vst.msk [vmem:[#allocation2 + $0x110] sm:$0xff] %vm219, 0.0
          %246 = vst.msk [vmem:[#allocation2 + $0x118] sm:$0xff] %vm219, 0.0
          %247 = vst.msk [vmem:[#allocation2 + $0x130] sm:$0xff] %vm219, 0.0
          %248 = vst.msk [vmem:[#allocation2 + $0x138] sm:$0xff] %vm219, 0.0
          %249 = vst.msk [vmem:[#allocation2 + $0x150] sm:$0xff] %vm219, 0.0
          %250 = vst.msk [vmem:[#allocation2 + $0x158] sm:$0xff] %vm219, 0.0
          %251 = vst.msk [vmem:[#allocation2 + $0x170] sm:$0xff] %vm219, 0.0
          %252 = vst.msk [vmem:[#allocation2 + $0x178] sm:$0xff] %vm219, 0.0
          %253 = vst.msk [vmem:[#allocation2 + $0x190] sm:$0xff] %vm219, 0.0
          %254 = vst.msk [vmem:[#allocation2 + $0x198] sm:$0xff] %vm219, 0.0
          %255 = vst.msk [vmem:[#allocation2 + $0x1b0] sm:$0xff] %vm219, 0.0
          %256 = vst.msk [vmem:[#allocation2 + $0x1b8] sm:$0xff] %vm219, 0.0
          %257 = vst.msk [vmem:[#allocation2 + $0x1d0] sm:$0xff] %vm219, 0.0
          %258 = vst.msk [vmem:[#allocation2 + $0x1d8] sm:$0xff] %vm219, 0.0
          %259 = vst.msk [vmem:[#allocation2 + $0x1f0] sm:$0xff] %vm219, 0.0
          %260 = vst.msk [vmem:[#allocation2 + $0x1f8] sm:$0xff] %vm219, 0.0
          %261 = vst.msk [vmem:[#allocation2 + $0x210] sm:$0xff] %vm219, 0.0
          %262 = vst.msk [vmem:[#allocation2 + $0x218] sm:$0xff] %vm219, 0.0
          %263 = vst.msk [vmem:[#allocation2 + $0x230] sm:$0xff] %vm219, 0.0
          %264 = vst.msk [vmem:[#allocation2 + $0x238] sm:$0xff] %vm219, 0.0
          %v265 = vld [vmem:[%s206] sm:$0xff]
          %v266 = vld [vmem:[%s206 + $0x8] sm:$0xff]
          %v267 = vld [vmem:[%s206 + $0x10] sm:$0xff]
          %v268 = vld [vmem:[%s206 + $0x18] sm:$0xff]
          %v269 = vld [vmem:[%s206 + $0x20] sm:$0xff]
          %v270 = vld [vmem:[%s206 + $0x28] sm:$0xff]
          %v271 = vld [vmem:[%s206 + $0x30] sm:$0xff]
          %v272 = vld [vmem:[%s206 + $0x38] sm:$0xff]
          %v273 = vld [vmem:[%s206 + $0x40] sm:$0xff]
          %v274 = vld [vmem:[%s206 + $0x48] sm:$0xff]
          %v275 = vld [vmem:[%s206 + $0x50] sm:$0xff]
          %v276 = vld [vmem:[%s206 + $0x58] sm:$0xff]
          %v277 = vld [vmem:[%s206 + $0x60] sm:$0xff]
          %v278 = vld [vmem:[%s206 + $0x68] sm:$0xff]
          %v279 = vld [vmem:[%s206 + $0x70] sm:$0xff]
          %v280 = vld [vmem:[%s206 + $0x78] sm:$0xff]
          %v281 = vld [vmem:[%s206 + $0x80] sm:$0xff]
          %v282 = vld [vmem:[%s206 + $0x88] sm:$0xff]
          %v283 = vld [vmem:[%s206 + $0x90] sm:$0xff]
          %v284 = vld [vmem:[%s206 + $0x98] sm:$0xff]
          %v285 = vld [vmem:[%s206 + $0xa0] sm:$0xff]
          %v286 = vld [vmem:[%s206 + $0xa8] sm:$0xff]
          %v287 = vld [vmem:[%s206 + $0xb0] sm:$0xff]
          %v288 = vld [vmem:[%s206 + $0xb8] sm:$0xff]
          %v289 = vld [vmem:[%s206 + $0xc0] sm:$0xff]
          %v290 = vld [vmem:[%s206 + $0xc8] sm:$0xff]
          %v291 = vld [vmem:[%s206 + $0xd0] sm:$0xff]
          %v292 = vld [vmem:[%s206 + $0xd8] sm:$0xff]
          %v293 = vld [vmem:[%s206 + $0xe0] sm:$0xff]
          %v294 = vld [vmem:[%s206 + $0xe8] sm:$0xff]
          %v295 = vld [vmem:[%s206 + $0xf0] sm:$0xff]
          %v296 = vld [vmem:[%s206 + $0xf8] sm:$0xff]
          %s297 = scalar_lea.vmem [#allocation2], 32
          %298 = vst.msk [vmem:[%s297] sm:$0xff] %vm219, %v265
          %299 = vst.msk [vmem:[%s297 + $0x8] sm:$0xff] %vm219, %v266
          %300 = vst.msk [vmem:[%s297 + $0x20] sm:$0xff] %vm219, %v267
          %301 = vst.msk [vmem:[%s297 + $0x28] sm:$0xff] %vm219, %v268
          %302 = vst.msk [vmem:[%s297 + $0x40] sm:$0xff] %vm219, %v269
          %303 = vst.msk [vmem:[%s297 + $0x48] sm:$0xff] %vm219, %v270
          %304 = vst.msk [vmem:[%s297 + $0x60] sm:$0xff] %vm219, %v271
          %305 = vst.msk [vmem:[%s297 + $0x68] sm:$0xff] %vm219, %v272
          %306 = vst.msk [vmem:[%s297 + $0x80] sm:$0xff] %vm219, %v273
          %307 = vst.msk [vmem:[%s297 + $0x88] sm:$0xff] %vm219, %v274
          %308 = vst.msk [vmem:[%s297 + $0xa0] sm:$0xff] %vm219, %v275
          %309 = vst.msk [vmem:[%s297 + $0xa8] sm:$0xff] %vm219, %v276
          %310 = vst.msk [vmem:[%s297 + $0xc0] sm:$0xff] %vm219, %v277
          %311 = vst.msk [vmem:[%s297 + $0xc8] sm:$0xff] %vm219, %v278
          %312 = vst.msk [vmem:[%s297 + $0xe0] sm:$0xff] %vm219, %v279
          %313 = vst.msk [vmem:[%s297 + $0xe8] sm:$0xff] %vm219, %v280
          %314 = vst.msk [vmem:[%s297 + $0x100] sm:$0xff] %vm219, %v281
          %315 = vst.msk [vmem:[%s297 + $0x108] sm:$0xff] %vm219, %v282
          %316 = vst.msk [vmem:[%s297 + $0x120] sm:$0xff] %vm219, %v283
          %317 = vst.msk [vmem:[%s297 + $0x128] sm:$0xff] %vm219, %v284
          %318 = vst.msk [vmem:[%s297 + $0x140] sm:$0xff] %vm219, %v285
          %319 = vst.msk [vmem:[%s297 + $0x148] sm:$0xff] %vm219, %v286
          %320 = vst.msk [vmem:[%s297 + $0x160] sm:$0xff] %vm219, %v287
          %321 = vst.msk [vmem:[%s297 + $0x168] sm:$0xff] %vm219, %v288
          %322 = vst.msk [vmem:[%s297 + $0x180] sm:$0xff] %vm219, %v289
          %323 = vst.msk [vmem:[%s297 + $0x188] sm:$0xff] %vm219, %v290
          %324 = vst.msk [vmem:[%s297 + $0x1a0] sm:$0xff] %vm219, %v291
          %325 = vst.msk [vmem:[%s297 + $0x1a8] sm:$0xff] %vm219, %v292
          %326 = vst.msk [vmem:[%s297 + $0x1c0] sm:$0xff] %vm219, %v293
          %327 = vst.msk [vmem:[%s297 + $0x1c8] sm:$0xff] %vm219, %v294
          %328 = vst.msk [vmem:[%s297 + $0x1e0] sm:$0xff] %vm219, %v295
          %329 = vst.msk [vmem:[%s297 + $0x1e8] sm:$0xff] %vm219, %v296
          %v330 = vld [vmem:[#allocation2] sm:$0xff]
          %v331 = vld [vmem:[#allocation2 + $0x8] sm:$0xff]
          %v332 = vld [vmem:[#allocation2 + $0x10] sm:$0xff]
          %v333 = vld [vmem:[#allocation2 + $0x18] sm:$0xff]
          %v334 = vld [vmem:[#allocation2 + $0x20] sm:$0xff]
          %v335 = vld [vmem:[#allocation2 + $0x28] sm:$0xff]
          %v336 = vld [vmem:[#allocation2 + $0x30] sm:$0xff]
          %v337 = vld [vmem:[#allocation2 + $0x38] sm:$0xff]
          %v338 = vld [vmem:[#allocation2 + $0x40] sm:$0xff]
          %v339 = vld [vmem:[#allocation2 + $0x48] sm:$0xff]
          %v340 = vld [vmem:[#allocation2 + $0x50] sm:$0xff]
          %v341 = vld [vmem:[#allocation2 + $0x58] sm:$0xff]
          %v342 = vld [vmem:[#allocation2 + $0x60] sm:$0xff]
          %v343 = vld [vmem:[#allocation2 + $0x68] sm:$0xff]
          %v344 = vld [vmem:[#allocation2 + $0x70] sm:$0xff]
          %v345 = vld [vmem:[#allocation2 + $0x78] sm:$0xff]
          %v346 = vld [vmem:[#allocation2 + $0x80] sm:$0xff]
          %v347 = vld [vmem:[#allocation2 + $0x88] sm:$0xff]
          %v348 = vld [vmem:[#allocation2 + $0x90] sm:$0xff]
          %v349 = vld [vmem:[#allocation2 + $0x98] sm:$0xff]
          %v350 = vld [vmem:[#allocation2 + $0xa0] sm:$0xff]
          %v351 = vld [vmem:[#allocation2 + $0xa8] sm:$0xff]
          %v352 = vld [vmem:[#allocation2 + $0xb0] sm:$0xff]
          %v353 = vld [vmem:[#allocation2 + $0xb8] sm:$0xff]
          %v354 = vld [vmem:[#allocation2 + $0xc0] sm:$0xff]
          %v355 = vld [vmem:[#allocation2 + $0xc8] sm:$0xff]
          %v356 = vld [vmem:[#allocation2 + $0xd0] sm:$0xff]
          %v357 = vld [vmem:[#allocation2 + $0xd8] sm:$0xff]
          %v358 = vld [vmem:[#allocation2 + $0xe0] sm:$0xff]
          %v359 = vld [vmem:[#allocation2 + $0xe8] sm:$0xff]
          %v360 = vld [vmem:[#allocation2 + $0xf0] sm:$0xff]
          %v361 = vld [vmem:[#allocation2 + $0xf8] sm:$0xff]
          %v362 = vld [vmem:[#allocation2 + $0x100] sm:$0xff]
          %v363 = vld [vmem:[#allocation2 + $0x108] sm:$0xff]
          %v364 = vld [vmem:[#allocation2 + $0x110] sm:$0xff]
          %v365 = vld [vmem:[#allocation2 + $0x118] sm:$0xff]
          %v366 = vld [vmem:[#allocation2 + $0x120] sm:$0xff]
          %v367 = vld [vmem:[#allocation2 + $0x128] sm:$0xff]
          %v368 = vld [vmem:[#allocation2 + $0x130] sm:$0xff]
          %v369 = vld [vmem:[#allocation2 + $0x138] sm:$0xff]
          %v370 = vld [vmem:[#allocation2 + $0x140] sm:$0xff]
          %v371 = vld [vmem:[#allocation2 + $0x148] sm:$0xff]
          %v372 = vld [vmem:[#allocation2 + $0x150] sm:$0xff]
          %v373 = vld [vmem:[#allocation2 + $0x158] sm:$0xff]
          %v374 = vld [vmem:[#allocation2 + $0x160] sm:$0xff]
          %v375 = vld [vmem:[#allocation2 + $0x168] sm:$0xff]
          %v376 = vld [vmem:[#allocation2 + $0x170] sm:$0xff]
          %v377 = vld [vmem:[#allocation2 + $0x178] sm:$0xff]
          %v378 = vld [vmem:[#allocation2 + $0x180] sm:$0xff]
          %v379 = vld [vmem:[#allocation2 + $0x188] sm:$0xff]
          %v380 = vld [vmem:[#allocation2 + $0x190] sm:$0xff]
          %v381 = vld [vmem:[#allocation2 + $0x198] sm:$0xff]
          %v382 = vld [vmem:[#allocation2 + $0x1a0] sm:$0xff]
          %v383 = vld [vmem:[#allocation2 + $0x1a8] sm:$0xff]
          %v384 = vld [vmem:[#allocation2 + $0x1b0] sm:$0xff]
          %v385 = vld [vmem:[#allocation2 + $0x1b8] sm:$0xff]
          %v386 = vld [vmem:[#allocation2 + $0x1c0] sm:$0xff]
          %v387 = vld [vmem:[#allocation2 + $0x1c8] sm:$0xff]
          %v388 = vld [vmem:[#allocation2 + $0x1d0] sm:$0xff]
          %v389 = vld [vmem:[#allocation2 + $0x1d8] sm:$0xff]
          %v390 = vld [vmem:[#allocation2 + $0x1e0] sm:$0xff]
          %v391 = vld [vmem:[#allocation2 + $0x1e8] sm:$0xff]
          %v392 = vld [vmem:[#allocation2 + $0x1f0] sm:$0xff]
          %v393 = vld [vmem:[#allocation2 + $0x1f8] sm:$0xff]
          %v394 = vld [vmem:[#allocation2 + $0x200] sm:$0xff]
          %v395 = vld [vmem:[#allocation2 + $0x208] sm:$0xff]
          %v396 = vld [vmem:[#allocation2 + $0x210] sm:$0xff]
          %v397 = vld [vmem:[#allocation2 + $0x218] sm:$0xff]
          %v398 = vld [vmem:[#allocation2 + $0x220] sm:$0xff]
          %v399 = vld [vmem:[#allocation2 + $0x228] sm:$0xff]
          %v400 = vld [vmem:[#allocation2 + $0x230] sm:$0xff]
          %v401 = vld [vmem:[#allocation2 + $0x238] sm:$0xff]
          %v402 = vrot.slane %v330, 7
          %v403 = vrot.slane %v334, 7
          %v404 = vrot.slane %v338, 7
          %v405 = vrot.slane %v342, 7
          %v406 = vrot.slane %v346, 7
          %v407 = vrot.slane %v350, 7
          %v408 = vrot.slane %v354, 7
          %v409 = vrot.slane %v358, 7
          %v410 = vrot.slane %v362, 7
          %v411 = vrot.slane %v366, 7
          %v412 = vrot.slane %v370, 7
          %v413 = vrot.slane %v374, 7
          %v414 = vrot.slane %v378, 7
          %v415 = vrot.slane %v382, 7
          %v416 = vrot.slane %v386, 7
          %v417 = vrot.slane %v390, 7
          %v418 = vrot.slane %v394, 7
          %v419 = vrot.slane %v398, 7
          %v420 = vrot.slane %v331, 7
          %v421 = vrot.slane %v335, 7
          %v422 = vrot.slane %v339, 7
          %v423 = vrot.slane %v343, 7
          %v424 = vrot.slane %v347, 7
          %v425 = vrot.slane %v351, 7
          %v426 = vrot.slane %v355, 7
          %v427 = vrot.slane %v359, 7
          %v428 = vrot.slane %v363, 7
          %v429 = vrot.slane %v367, 7
          %v430 = vrot.slane %v371, 7
          %v431 = vrot.slane %v375, 7
          %v432 = vrot.slane %v379, 7
          %v433 = vrot.slane %v383, 7
          %v434 = vrot.slane %v387, 7
          %v435 = vrot.slane %v391, 7
          %v436 = vrot.slane %v395, 7
          %v437 = vrot.slane %v399, 7
          %v438 = vrot.slane %v333, 7
          %v439 = vrot.slane %v337, 7
          %v440 = vrot.slane %v341, 7
          %v441 = vrot.slane %v345, 7
          %v442 = vrot.slane %v349, 7
          %v443 = vrot.slane %v353, 7
          %v444 = vrot.slane %v357, 7
          %v445 = vrot.slane %v361, 7
          %v446 = vrot.slane %v365, 7
          %v447 = vrot.slane %v369, 7
          %v448 = vrot.slane %v373, 7
          %v449 = vrot.slane %v377, 7
          %v450 = vrot.slane %v381, 7
          %v451 = vrot.slane %v385, 7
          %v452 = vrot.slane %v389, 7
          %v453 = vrot.slane %v393, 7
          %v454 = vrot.slane %v397, 7
          %v455 = vrot.slane %v401, 7
          %v456 = vlaneseq
          %v457 = vshrl.u32 %v456, 7
          %vm458 = vcmp.lt.s32.totalorder %v457, 1
          %v459 = vsel %vm458, %v402, %v420
          %v460 = vsel %vm458, %v403, %v421
          %v461 = vsel %vm458, %v404, %v422
          %v462 = vsel %vm458, %v405, %v423
          %v463 = vsel %vm458, %v406, %v424
          %v464 = vsel %vm458, %v407, %v425
          %v465 = vsel %vm458, %v408, %v426
          %v466 = vsel %vm458, %v409, %v427
          %v467 = vsel %vm458, %v410, %v428
          %v468 = vsel %vm458, %v411, %v429
          %v469 = vsel %vm458, %v412, %v430
          %v470 = vsel %vm458, %v413, %v431
          %v471 = vsel %vm458, %v414, %v432
          %v472 = vsel %vm458, %v415, %v433
          %v473 = vsel %vm458, %v416, %v434
          %v474 = vsel %vm458, %v417, %v435
          %v475 = vsel %vm458, %v418, %v436
          %v476 = vsel %vm458, %v419, %v437
          %v477 = vsel %vm458, %v438, %v402
          %v478 = vsel %vm458, %v439, %v403
          %v479 = vsel %vm458, %v440, %v404
          %v480 = vsel %vm458, %v441, %v405
          %v481 = vsel %vm458, %v442, %v406
          %v482 = vsel %vm458, %v443, %v407
          %v483 = vsel %vm458, %v444, %v408
          %v484 = vsel %vm458, %v445, %v409
          %v485 = vsel %vm458, %v446, %v410
          %v486 = vsel %vm458, %v447, %v411
          %v487 = vsel %vm458, %v448, %v412
          %v488 = vsel %vm458, %v449, %v413
          %v489 = vsel %vm458, %v450, %v414
          %v490 = vsel %vm458, %v451, %v415
          %v491 = vsel %vm458, %v452, %v416
          %v492 = vsel %vm458, %v453, %v417
          %v493 = vsel %vm458, %v454, %v418
          %v494 = vsel %vm458, %v455, %v419
          %v495 = vpack.c.bf16 %v477, %v477
          %v496 = vpack.c.bf16 %v459, %v459
          %v497 = vpack.c.bf16 %v478, %v478
          %v498 = vpack.c.bf16 %v460, %v460
          %v499 = vpack.c.bf16 %v479, %v479
          %v500 = vpack.c.bf16 %v461, %v461
          %v501 = vpack.c.bf16 %v480, %v480
          %v502 = vpack.c.bf16 %v462, %v462
          %v503 = vpack.c.bf16 %v481, %v481
          %v504 = vpack.c.bf16 %v463, %v463
          %v505 = vpack.c.bf16 %v482, %v482
          %v506 = vpack.c.bf16 %v464, %v464
          %v507 = vpack.c.bf16 %v483, %v483
          %v508 = vpack.c.bf16 %v465, %v465
          %v509 = vpack.c.bf16 %v484, %v484
          %v510 = vpack.c.bf16 %v466, %v466
          %v511 = vpack.c.bf16 %v485, %v485
          %v512 = vpack.c.bf16 %v467, %v467
          %v513 = vpack.c.bf16 %v486, %v486
          %v514 = vpack.c.bf16 %v468, %v468
          %v515 = vpack.c.bf16 %v487, %v487
          %v516 = vpack.c.bf16 %v469, %v469
          %v517 = vpack.c.bf16 %v488, %v488
          %v518 = vpack.c.bf16 %v470, %v470
          %v519 = vpack.c.bf16 %v489, %v489
          %v520 = vpack.c.bf16 %v471, %v471
          %v521 = vpack.c.bf16 %v490, %v490
          %v522 = vpack.c.bf16 %v472, %v472
          %v523 = vpack.c.bf16 %v491, %v491
          %v524 = vpack.c.bf16 %v473, %v473
          %v525 = vpack.c.bf16 %v492, %v492
          %v526 = vpack.c.bf16 %v474, %v474
          %v527 = vpack.c.bf16 %v493, %v493
          %v528 = vpack.c.bf16 %v475, %v475
          %v529 = vpack.c.bf16 %v494, %v494
          %v530 = vpack.c.bf16 %v476, %v476
          %vm531 = vcmask 27648
          %532 = vst.msk [vmem:[#allocation3] sm:$0xf] %vm531, %v495
          %533 = vst.msk [vmem:[#allocation3 + $0x4] sm:$0xf] %vm531, %v496
          %534 = vst.msk [vmem:[#allocation3 + $0x8] sm:$0xf] %vm531, %v497
          %535 = vst.msk [vmem:[#allocation3 + $0xc] sm:$0xf] %vm531, %v498
          %536 = vst.msk [vmem:[#allocation3 + $0x10] sm:$0xf] %vm531, %v499
          %537 = vst.msk [vmem:[#allocation3 + $0x14] sm:$0xf] %vm531, %v500
          %538 = vst.msk [vmem:[#allocation3 + $0x18] sm:$0xf] %vm531, %v501
          %539 = vst.msk [vmem:[#allocation3 + $0x1c] sm:$0xf] %vm531, %v502
          %540 = vst.msk [vmem:[#allocation3 + $0x20] sm:$0xf] %vm531, %v503
          %541 = vst.msk [vmem:[#allocation3 + $0x24] sm:$0xf] %vm531, %v504
          %542 = vst.msk [vmem:[#allocation3 + $0x28] sm:$0xf] %vm531, %v505
          %543 = vst.msk [vmem:[#allocation3 + $0x2c] sm:$0xf] %vm531, %v506
          %544 = vst.msk [vmem:[#allocation3 + $0x30] sm:$0xf] %vm531, %v507
          %545 = vst.msk [vmem:[#allocation3 + $0x34] sm:$0xf] %vm531, %v508
          %546 = vst.msk [vmem:[#allocation3 + $0x38] sm:$0xf] %vm531, %v509
          %547 = vst.msk [vmem:[#allocation3 + $0x3c] sm:$0xf] %vm531, %v510
          %548 = vst.msk [vmem:[#allocation3 + $0x40] sm:$0xf] %vm531, %v511
          %549 = vst.msk [vmem:[#allocation3 + $0x44] sm:$0xf] %vm531, %v512
          %550 = vst.msk [vmem:[#allocation3 + $0x48] sm:$0xf] %vm531, %v513
          %551 = vst.msk [vmem:[#allocation3 + $0x4c] sm:$0xf] %vm531, %v514
          %552 = vst.msk [vmem:[#allocation3 + $0x50] sm:$0xf] %vm531, %v515
          %553 = vst.msk [vmem:[#allocation3 + $0x54] sm:$0xf] %vm531, %v516
          %554 = vst.msk [vmem:[#allocation3 + $0x58] sm:$0xf] %vm531, %v517
          %555 = vst.msk [vmem:[#allocation3 + $0x5c] sm:$0xf] %vm531, %v518
          %556 = vst.msk [vmem:[#allocation3 + $0x60] sm:$0xf] %vm531, %v519
          %557 = vst.msk [vmem:[#allocation3 + $0x64] sm:$0xf] %vm531, %v520
          %558 = vst.msk [vmem:[#allocation3 + $0x68] sm:$0xf] %vm531, %v521
          %559 = vst.msk [vmem:[#allocation3 + $0x6c] sm:$0xf] %vm531, %v522
          %560 = vst.msk [vmem:[#allocation3 + $0x70] sm:$0xf] %vm531, %v523
          %561 = vst.msk [vmem:[#allocation3 + $0x74] sm:$0xf] %vm531, %v524
          %562 = vst.msk [vmem:[#allocation3 + $0x78] sm:$0xf] %vm531, %v525
          %563 = vst.msk [vmem:[#allocation3 + $0x7c] sm:$0xf] %vm531, %v526
          %596 = vrot.lane.b32.xlu0 %v497, 12
          %v597 = vpop.permute.xlu0 %596
          %598 = vrot.lane.b32.xlu0 %v498, 12
          %v599 = vpop.permute.xlu0 %598
          %600 = vrot.lane.b32.xlu0 %v499, 12
          %v601 = vpop.permute.xlu0 %600
          %602 = vrot.lane.b32.xlu0 %v500, 12
          %v603 = vpop.permute.xlu0 %602
          %604 = vrot.lane.b32.xlu0 %v501, 12
          %v605 = vpop.permute.xlu0 %604
          %606 = vrot.lane.b32.xlu0 %v502, 12
          %v607 = vpop.permute.xlu0 %606
          %608 = vrot.lane.b32.xlu0 %v503, 12
          %v609 = vpop.permute.xlu0 %608
          %610 = vrot.lane.b32.xlu0 %v504, 12
          %v611 = vpop.permute.xlu0 %610
          %612 = vrot.lane.b32.xlu0 %v505, 12
          %v613 = vpop.permute.xlu0 %612
          %614 = vrot.lane.b32.xlu0 %v506, 12
          %v615 = vpop.permute.xlu0 %614
          %616 = vrot.lane.b32.xlu0 %v507, 12
          %v617 = vpop.permute.xlu0 %616
          %618 = vrot.lane.b32.xlu0 %v508, 12
          %v619 = vpop.permute.xlu0 %618
          %620 = vrot.lane.b32.xlu0 %v509, 12
          %v621 = vpop.permute.xlu0 %620
          %622 = vrot.lane.b32.xlu0 %v510, 12
          %v623 = vpop.permute.xlu0 %622
          %624 = vrot.lane.b32.xlu0 %v511, 12
          %v625 = vpop.permute.xlu0 %624
          %626 = vrot.lane.b32.xlu0 %v512, 12
          %v627 = vpop.permute.xlu0 %626
          %628 = vrot.lane.b32.xlu0 %v513, 12
          %v629 = vpop.permute.xlu0 %628
          %630 = vrot.lane.b32.xlu0 %v514, 12
          %v631 = vpop.permute.xlu0 %630
          %632 = vrot.lane.b32.xlu0 %v515, 12
          %v633 = vpop.permute.xlu0 %632
          %634 = vrot.lane.b32.xlu0 %v516, 12
          %v635 = vpop.permute.xlu0 %634
          %636 = vrot.lane.b32.xlu0 %v517, 12
          %v637 = vpop.permute.xlu0 %636
          %638 = vrot.lane.b32.xlu0 %v518, 12
          %v639 = vpop.permute.xlu0 %638
          %640 = vrot.lane.b32.xlu0 %v519, 12
          %v641 = vpop.permute.xlu0 %640
          %642 = vrot.lane.b32.xlu0 %v520, 12
          %v643 = vpop.permute.xlu0 %642
          %644 = vrot.lane.b32.xlu0 %v521, 12
          %v645 = vpop.permute.xlu0 %644
          %646 = vrot.lane.b32.xlu0 %v522, 12
          %v647 = vpop.permute.xlu0 %646
          %648 = vrot.lane.b32.xlu0 %v523, 12
          %v649 = vpop.permute.xlu0 %648
          %650 = vrot.lane.b32.xlu0 %v524, 12
          %v651 = vpop.permute.xlu0 %650
          %652 = vrot.lane.b32.xlu0 %v525, 12
          %v653 = vpop.permute.xlu0 %652
          %654 = vrot.lane.b32.xlu0 %v526, 12
          %v655 = vpop.permute.xlu0 %654
          %656 = vrot.lane.b32.xlu0 %v527, 12
          %v657 = vpop.permute.xlu0 %656
          %658 = vrot.lane.b32.xlu0 %v528, 12
          %v659 = vpop.permute.xlu0 %658
          %vm692 = vcmask 126048
          %693 = vst.msk [vmem:[#allocation3] sm:$0xf] %vm692, %v597
          %694 = vst.msk [vmem:[#allocation3 + $0x4] sm:$0xf] %vm692, %v599
          %695 = vst.msk [vmem:[#allocation3 + $0x8] sm:$0xf] %vm692, %v601
          %696 = vst.msk [vmem:[#allocation3 + $0xc] sm:$0xf] %vm692, %v603
          %697 = vst.msk [vmem:[#allocation3 + $0x10] sm:$0xf] %vm692, %v605
          %698 = vst.msk [vmem:[#allocation3 + $0x14] sm:$0xf] %vm692, %v607
          %699 = vst.msk [vmem:[#allocation3 + $0x18] sm:$0xf] %vm692, %v609
          %700 = vst.msk [vmem:[#allocation3 + $0x1c] sm:$0xf] %vm692, %v611
          %701 = vst.msk [vmem:[#allocation3 + $0x20] sm:$0xf] %vm692, %v613
          %702 = vst.msk [vmem:[#allocation3 + $0x24] sm:$0xf] %vm692, %v615
          %703 = vst.msk [vmem:[#allocation3 + $0x28] sm:$0xf] %vm692, %v617
          %704 = vst.msk [vmem:[#allocation3 + $0x2c] sm:$0xf] %vm692, %v619
          %705 = vst.msk [vmem:[#allocation3 + $0x30] sm:$0xf] %vm692, %v621
          %706 = vst.msk [vmem:[#allocation3 + $0x34] sm:$0xf] %vm692, %v623
          %707 = vst.msk [vmem:[#allocation3 + $0x38] sm:$0xf] %vm692, %v625
          %708 = vst.msk [vmem:[#allocation3 + $0x3c] sm:$0xf] %vm692, %v627
          %709 = vst.msk [vmem:[#allocation3 + $0x40] sm:$0xf] %vm692, %v629
          %710 = vst.msk [vmem:[#allocation3 + $0x44] sm:$0xf] %vm692, %v631
          %711 = vst.msk [vmem:[#allocation3 + $0x48] sm:$0xf] %vm692, %v633
          %712 = vst.msk [vmem:[#allocation3 + $0x4c] sm:$0xf] %vm692, %v635
          %713 = vst.msk [vmem:[#allocation3 + $0x50] sm:$0xf] %vm692, %v637
          %714 = vst.msk [vmem:[#allocation3 + $0x54] sm:$0xf] %vm692, %v639
          %715 = vst.msk [vmem:[#allocation3 + $0x58] sm:$0xf] %vm692, %v641
          %716 = vst.msk [vmem:[#allocation3 + $0x5c] sm:$0xf] %vm692, %v643
          %717 = vst.msk [vmem:[#allocation3 + $0x60] sm:$0xf] %vm692, %v645
          %718 = vst.msk [vmem:[#allocation3 + $0x64] sm:$0xf] %vm692, %v647
          %719 = vst.msk [vmem:[#allocation3 + $0x68] sm:$0xf] %vm692, %v649
          %720 = vst.msk [vmem:[#allocation3 + $0x6c] sm:$0xf] %vm692, %v651
          %721 = vst.msk [vmem:[#allocation3 + $0x70] sm:$0xf] %vm692, %v653
          %722 = vst.msk [vmem:[#allocation3 + $0x74] sm:$0xf] %vm692, %v655
          %723 = vst.msk [vmem:[#allocation3 + $0x78] sm:$0xf] %vm692, %v657
          %724 = vst.msk [vmem:[#allocation3 + $0x7c] sm:$0xf] %vm692, %v659
          %727 = vrot.lane.b32.xlu0 %v499, 24
          %v728 = vpop.permute.xlu0 %727
          %729 = vrot.lane.b32.xlu0 %v500, 24
          %v730 = vpop.permute.xlu0 %729
          %731 = vrot.lane.b32.xlu0 %v501, 24
          %v732 = vpop.permute.xlu0 %731
          %733 = vrot.lane.b32.xlu0 %v502, 24
          %v734 = vpop.permute.xlu0 %733
          %735 = vrot.lane.b32.xlu0 %v503, 24
          %v736 = vpop.permute.xlu0 %735
          %737 = vrot.lane.b32.xlu0 %v504, 24
          %v738 = vpop.permute.xlu0 %737
          %739 = vrot.lane.b32.xlu0 %v505, 24
          %v740 = vpop.permute.xlu0 %739
          %741 = vrot.lane.b32.xlu0 %v506, 24
          %v742 = vpop.permute.xlu0 %741
          %743 = vrot.lane.b32.xlu0 %v507, 24
          %v744 = vpop.permute.xlu0 %743
          %745 = vrot.lane.b32.xlu0 %v508, 24
          %v746 = vpop.permute.xlu0 %745
          %747 = vrot.lane.b32.xlu0 %v509, 24
          %v748 = vpop.permute.xlu0 %747
          %749 = vrot.lane.b32.xlu0 %v510, 24
          %v750 = vpop.permute.xlu0 %749
          %751 = vrot.lane.b32.xlu0 %v511, 24
          %v752 = vpop.permute.xlu0 %751
          %753 = vrot.lane.b32.xlu0 %v512, 24
          %v754 = vpop.permute.xlu0 %753
          %755 = vrot.lane.b32.xlu0 %v513, 24
          %v756 = vpop.permute.xlu0 %755
          %757 = vrot.lane.b32.xlu0 %v514, 24
          %v758 = vpop.permute.xlu0 %757
          %759 = vrot.lane.b32.xlu0 %v515, 24
          %v760 = vpop.permute.xlu0 %759
          %761 = vrot.lane.b32.xlu0 %v516, 24
          %v762 = vpop.permute.xlu0 %761
          %763 = vrot.lane.b32.xlu0 %v517, 24
          %v764 = vpop.permute.xlu0 %763
          %765 = vrot.lane.b32.xlu0 %v518, 24
          %v766 = vpop.permute.xlu0 %765
          %767 = vrot.lane.b32.xlu0 %v519, 24
          %v768 = vpop.permute.xlu0 %767
          %769 = vrot.lane.b32.xlu0 %v520, 24
          %v770 = vpop.permute.xlu0 %769
          %771 = vrot.lane.b32.xlu0 %v521, 24
          %v772 = vpop.permute.xlu0 %771
          %773 = vrot.lane.b32.xlu0 %v522, 24
          %v774 = vpop.permute.xlu0 %773
          %775 = vrot.lane.b32.xlu0 %v523, 24
          %v776 = vpop.permute.xlu0 %775
          %777 = vrot.lane.b32.xlu0 %v524, 24
          %v778 = vpop.permute.xlu0 %777
          %779 = vrot.lane.b32.xlu0 %v525, 24
          %v780 = vpop.permute.xlu0 %779
          %781 = vrot.lane.b32.xlu0 %v526, 24
          %v782 = vpop.permute.xlu0 %781
          %783 = vrot.lane.b32.xlu0 %v527, 24
          %v784 = vpop.permute.xlu0 %783
          %785 = vrot.lane.b32.xlu0 %v528, 24
          %v786 = vpop.permute.xlu0 %785
          %787 = vrot.lane.b32.xlu0 %v529, 24
          %v788 = vpop.permute.xlu0 %787
          %789 = vrot.lane.b32.xlu0 %v530, 24
          %v790 = vpop.permute.xlu0 %789
          %vm823 = vcmask 224448
          %824 = vst.msk [vmem:[#allocation3] sm:$0xf] %vm823, %v728
          %825 = vst.msk [vmem:[#allocation3 + $0x4] sm:$0xf] %vm823, %v730
          %826 = vst.msk [vmem:[#allocation3 + $0x8] sm:$0xf] %vm823, %v732
          %827 = vst.msk [vmem:[#allocation3 + $0xc] sm:$0xf] %vm823, %v734
          %828 = vst.msk [vmem:[#allocation3 + $0x10] sm:$0xf] %vm823, %v736
          %829 = vst.msk [vmem:[#allocation3 + $0x14] sm:$0xf] %vm823, %v738
          %830 = vst.msk [vmem:[#allocation3 + $0x18] sm:$0xf] %vm823, %v740
          %831 = vst.msk [vmem:[#allocation3 + $0x1c] sm:$0xf] %vm823, %v742
          %832 = vst.msk [vmem:[#allocation3 + $0x20] sm:$0xf] %vm823, %v744
          %833 = vst.msk [vmem:[#allocation3 + $0x24] sm:$0xf] %vm823, %v746
          %834 = vst.msk [vmem:[#allocation3 + $0x28] sm:$0xf] %vm823, %v748
          %835 = vst.msk [vmem:[#allocation3 + $0x2c] sm:$0xf] %vm823, %v750
          %836 = vst.msk [vmem:[#allocation3 + $0x30] sm:$0xf] %vm823, %v752
          %837 = vst.msk [vmem:[#allocation3 + $0x34] sm:$0xf] %vm823, %v754
          %838 = vst.msk [vmem:[#allocation3 + $0x38] sm:$0xf] %vm823, %v756
          %839 = vst.msk [vmem:[#allocation3 + $0x3c] sm:$0xf] %vm823, %v758
          %840 = vst.msk [vmem:[#allocation3 + $0x40] sm:$0xf] %vm823, %v760
          %841 = vst.msk [vmem:[#allocation3 + $0x44] sm:$0xf] %vm823, %v762
          %842 = vst.msk [vmem:[#allocation3 + $0x48] sm:$0xf] %vm823, %v764
          %843 = vst.msk [vmem:[#allocation3 + $0x4c] sm:$0xf] %vm823, %v766
          %844 = vst.msk [vmem:[#allocation3 + $0x50] sm:$0xf] %vm823, %v768
          %845 = vst.msk [vmem:[#allocation3 + $0x54] sm:$0xf] %vm823, %v770
          %846 = vst.msk [vmem:[#allocation3 + $0x58] sm:$0xf] %vm823, %v772
          %847 = vst.msk [vmem:[#allocation3 + $0x5c] sm:$0xf] %vm823, %v774
          %848 = vst.msk [vmem:[#allocation3 + $0x60] sm:$0xf] %vm823, %v776
          %849 = vst.msk [vmem:[#allocation3 + $0x64] sm:$0xf] %vm823, %v778
          %850 = vst.msk [vmem:[#allocation3 + $0x68] sm:$0xf] %vm823, %v780
          %851 = vst.msk [vmem:[#allocation3 + $0x6c] sm:$0xf] %vm823, %v782
          %852 = vst.msk [vmem:[#allocation3 + $0x70] sm:$0xf] %vm823, %v784
          %853 = vst.msk [vmem:[#allocation3 + $0x74] sm:$0xf] %vm823, %v786
          %854 = vst.msk [vmem:[#allocation3 + $0x78] sm:$0xf] %vm823, %v788
          %855 = vst.msk [vmem:[#allocation3 + $0x7c] sm:$0xf] %vm823, %v790
          %v856 = vpack.c.bf16 %v330, %v330
          %v857 = vpack.c.bf16 %v331, %v331
          %v858 = vpack.c.bf16 %v334, %v334
          %v859 = vpack.c.bf16 %v335, %v335
          %v860 = vpack.c.bf16 %v338, %v338
          %v861 = vpack.c.bf16 %v339, %v339
          %v862 = vpack.c.bf16 %v342, %v342
          %v863 = vpack.c.bf16 %v343, %v343
          %v864 = vpack.c.bf16 %v346, %v346
          %v865 = vpack.c.bf16 %v347, %v347
          %v866 = vpack.c.bf16 %v350, %v350
          %v867 = vpack.c.bf16 %v351, %v351
          %v868 = vpack.c.bf16 %v354, %v354
          %v869 = vpack.c.bf16 %v355, %v355
          %v870 = vpack.c.bf16 %v358, %v358
          %v871 = vpack.c.bf16 %v359, %v359
          %v872 = vpack.c.bf16 %v362, %v362
          %v873 = vpack.c.bf16 %v363, %v363
          %v874 = vpack.c.bf16 %v366, %v366
          %v875 = vpack.c.bf16 %v367, %v367
          %v876 = vpack.c.bf16 %v370, %v370
          %v877 = vpack.c.bf16 %v371, %v371
          %v878 = vpack.c.bf16 %v374, %v374
          %v879 = vpack.c.bf16 %v375, %v375
          %v880 = vpack.c.bf16 %v378, %v378
          %v881 = vpack.c.bf16 %v379, %v379
          %v882 = vpack.c.bf16 %v382, %v382
          %v883 = vpack.c.bf16 %v383, %v383
          %v884 = vpack.c.bf16 %v386, %v386
          %v885 = vpack.c.bf16 %v387, %v387
          %v886 = vpack.c.bf16 %v390, %v390
          %v887 = vpack.c.bf16 %v391, %v391
          %v888 = vpack.c.bf16 %v394, %v394
          %v889 = vpack.c.bf16 %v395, %v395
          %v890 = vpack.c.bf16 %v398, %v398
          %v891 = vpack.c.bf16 %v399, %v399
          %924 = vrot.lane.b32.xlu0 %v856, 4
          %v925 = vpop.permute.xlu0 %924
          %926 = vrot.lane.b32.xlu0 %v857, 4
          %v927 = vpop.permute.xlu0 %926
          %928 = vrot.lane.b32.xlu0 %v858, 4
          %v929 = vpop.permute.xlu0 %928
          %930 = vrot.lane.b32.xlu0 %v859, 4
          %v931 = vpop.permute.xlu0 %930
          %932 = vrot.lane.b32.xlu0 %v860, 4
          %v933 = vpop.permute.xlu0 %932
          %934 = vrot.lane.b32.xlu0 %v861, 4
          %v935 = vpop.permute.xlu0 %934
          %936 = vrot.lane.b32.xlu0 %v862, 4
          %v937 = vpop.permute.xlu0 %936
          %938 = vrot.lane.b32.xlu0 %v863, 4
          %v939 = vpop.permute.xlu0 %938
          %940 = vrot.lane.b32.xlu0 %v864, 4
          %v941 = vpop.permute.xlu0 %940
          %942 = vrot.lane.b32.xlu0 %v865, 4
          %v943 = vpop.permute.xlu0 %942
          %944 = vrot.lane.b32.xlu0 %v866, 4
          %v945 = vpop.permute.xlu0 %944
          %946 = vrot.lane.b32.xlu0 %v867, 4
          %v947 = vpop.permute.xlu0 %946
          %948 = vrot.lane.b32.xlu0 %v868, 4
          %v949 = vpop.permute.xlu0 %948
          %950 = vrot.lane.b32.xlu0 %v869, 4
          %v951 = vpop.permute.xlu0 %950
          %952 = vrot.lane.b32.xlu0 %v870, 4
          %v953 = vpop.permute.xlu0 %952
          %954 = vrot.lane.b32.xlu0 %v871, 4
          %v955 = vpop.permute.xlu0 %954
          %956 = vrot.lane.b32.xlu0 %v872, 4
          %v957 = vpop.permute.xlu0 %956
          %958 = vrot.lane.b32.xlu0 %v873, 4
          %v959 = vpop.permute.xlu0 %958
          %960 = vrot.lane.b32.xlu0 %v874, 4
          %v961 = vpop.permute.xlu0 %960
          %962 = vrot.lane.b32.xlu0 %v875, 4
          %v963 = vpop.permute.xlu0 %962
          %964 = vrot.lane.b32.xlu0 %v876, 4
          %v965 = vpop.permute.xlu0 %964
          %966 = vrot.lane.b32.xlu0 %v877, 4
          %v967 = vpop.permute.xlu0 %966
          %968 = vrot.lane.b32.xlu0 %v878, 4
          %v969 = vpop.permute.xlu0 %968
          %970 = vrot.lane.b32.xlu0 %v879, 4
          %v971 = vpop.permute.xlu0 %970
          %972 = vrot.lane.b32.xlu0 %v880, 4
          %v973 = vpop.permute.xlu0 %972
          %974 = vrot.lane.b32.xlu0 %v881, 4
          %v975 = vpop.permute.xlu0 %974
          %976 = vrot.lane.b32.xlu0 %v882, 4
          %v977 = vpop.permute.xlu0 %976
          %978 = vrot.lane.b32.xlu0 %v883, 4
          %v979 = vpop.permute.xlu0 %978
          %980 = vrot.lane.b32.xlu0 %v884, 4
          %v981 = vpop.permute.xlu0 %980
          %982 = vrot.lane.b32.xlu0 %v885, 4
          %v983 = vpop.permute.xlu0 %982
          %984 = vrot.lane.b32.xlu0 %v886, 4
          %v985 = vpop.permute.xlu0 %984
          %986 = vrot.lane.b32.xlu0 %v887, 4
          %v987 = vpop.permute.xlu0 %986
          %vm1020 = vcmask 60448
          %1021 = vst.msk [vmem:[#allocation3] sm:$0xf] %vm1020, %v925
          %1022 = vst.msk [vmem:[#allocation3 + $0x4] sm:$0xf] %vm1020, %v927
          %1023 = vst.msk [vmem:[#allocation3 + $0x8] sm:$0xf] %vm1020, %v929
          %1024 = vst.msk [vmem:[#allocation3 + $0xc] sm:$0xf] %vm1020, %v931
          %1025 = vst.msk [vmem:[#allocation3 + $0x10] sm:$0xf] %vm1020, %v933
          %1026 = vst.msk [vmem:[#allocation3 + $0x14] sm:$0xf] %vm1020, %v935
          %1027 = vst.msk [vmem:[#allocation3 + $0x18] sm:$0xf] %vm1020, %v937
          %1028 = vst.msk [vmem:[#allocation3 + $0x1c] sm:$0xf] %vm1020, %v939
          %1029 = vst.msk [vmem:[#allocation3 + $0x20] sm:$0xf] %vm1020, %v941
          %1030 = vst.msk [vmem:[#allocation3 + $0x24] sm:$0xf] %vm1020, %v943
          %1031 = vst.msk [vmem:[#allocation3 + $0x28] sm:$0xf] %vm1020, %v945
          %1032 = vst.msk [vmem:[#allocation3 + $0x2c] sm:$0xf] %vm1020, %v947
          %1033 = vst.msk [vmem:[#allocation3 + $0x30] sm:$0xf] %vm1020, %v949
          %1034 = vst.msk [vmem:[#allocation3 + $0x34] sm:$0xf] %vm1020, %v951
          %1035 = vst.msk [vmem:[#allocation3 + $0x38] sm:$0xf] %vm1020, %v953
          %1036 = vst.msk [vmem:[#allocation3 + $0x3c] sm:$0xf] %vm1020, %v955
          %1037 = vst.msk [vmem:[#allocation3 + $0x40] sm:$0xf] %vm1020, %v957
          %1038 = vst.msk [vmem:[#allocation3 + $0x44] sm:$0xf] %vm1020, %v959
          %1039 = vst.msk [vmem:[#allocation3 + $0x48] sm:$0xf] %vm1020, %v961
          %1040 = vst.msk [vmem:[#allocation3 + $0x4c] sm:$0xf] %vm1020, %v963
          %1041 = vst.msk [vmem:[#allocation3 + $0x50] sm:$0xf] %vm1020, %v965
          %1042 = vst.msk [vmem:[#allocation3 + $0x54] sm:$0xf] %vm1020, %v967
          %1043 = vst.msk [vmem:[#allocation3 + $0x58] sm:$0xf] %vm1020, %v969
          %1044 = vst.msk [vmem:[#allocation3 + $0x5c] sm:$0xf] %vm1020, %v971
          %1045 = vst.msk [vmem:[#allocation3 + $0x60] sm:$0xf] %vm1020, %v973
          %1046 = vst.msk [vmem:[#allocation3 + $0x64] sm:$0xf] %vm1020, %v975
          %1047 = vst.msk [vmem:[#allocation3 + $0x68] sm:$0xf] %vm1020, %v977
          %1048 = vst.msk [vmem:[#allocation3 + $0x6c] sm:$0xf] %vm1020, %v979
          %1049 = vst.msk [vmem:[#allocation3 + $0x70] sm:$0xf] %vm1020, %v981
          %1050 = vst.msk [vmem:[#allocation3 + $0x74] sm:$0xf] %vm1020, %v983
          %1051 = vst.msk [vmem:[#allocation3 + $0x78] sm:$0xf] %vm1020, %v985
          %1052 = vst.msk [vmem:[#allocation3 + $0x7c] sm:$0xf] %vm1020, %v987
          %1055 = vrot.lane.b32.xlu0 %v858, 16
          %v1056 = vpop.permute.xlu0 %1055
          %1057 = vrot.lane.b32.xlu0 %v859, 16
          %v1058 = vpop.permute.xlu0 %1057
          %1059 = vrot.lane.b32.xlu0 %v860, 16
          %v1060 = vpop.permute.xlu0 %1059
          %1061 = vrot.lane.b32.xlu0 %v861, 16
          %v1062 = vpop.permute.xlu0 %1061
          %1063 = vrot.lane.b32.xlu0 %v862, 16
          %v1064 = vpop.permute.xlu0 %1063
          %1065 = vrot.lane.b32.xlu0 %v863, 16
          %v1066 = vpop.permute.xlu0 %1065
          %1067 = vrot.lane.b32.xlu0 %v864, 16
          %v1068 = vpop.permute.xlu0 %1067
          %1069 = vrot.lane.b32.xlu0 %v865, 16
          %v1070 = vpop.permute.xlu0 %1069
          %1071 = vrot.lane.b32.xlu0 %v866, 16
          %v1072 = vpop.permute.xlu0 %1071
          %1073 = vrot.lane.b32.xlu0 %v867, 16
          %v1074 = vpop.permute.xlu0 %1073
          %1075 = vrot.lane.b32.xlu0 %v868, 16
          %v1076 = vpop.permute.xlu0 %1075
          %1077 = vrot.lane.b32.xlu0 %v869, 16
          %v1078 = vpop.permute.xlu0 %1077
          %1079 = vrot.lane.b32.xlu0 %v870, 16
          %v1080 = vpop.permute.xlu0 %1079
          %1081 = vrot.lane.b32.xlu0 %v871, 16
          %v1082 = vpop.permute.xlu0 %1081
          %1083 = vrot.lane.b32.xlu0 %v872, 16
          %v1084 = vpop.permute.xlu0 %1083
          %1085 = vrot.lane.b32.xlu0 %v873, 16
          %v1086 = vpop.permute.xlu0 %1085
          %1087 = vrot.lane.b32.xlu0 %v874, 16
          %v1088 = vpop.permute.xlu0 %1087
          %1089 = vrot.lane.b32.xlu0 %v875, 16
          %v1090 = vpop.permute.xlu0 %1089
          %1091 = vrot.lane.b32.xlu0 %v876, 16
          %v1092 = vpop.permute.xlu0 %1091
          %1093 = vrot.lane.b32.xlu0 %v877, 16
          %v1094 = vpop.permute.xlu0 %1093
          %1095 = vrot.lane.b32.xlu0 %v878, 16
          %v1096 = vpop.permute.xlu0 %1095
          %1097 = vrot.lane.b32.xlu0 %v879, 16
          %v1098 = vpop.permute.xlu0 %1097
          %1099 = vrot.lane.b32.xlu0 %v880, 16
          %v1100 = vpop.permute.xlu0 %1099
          %1101 = vrot.lane.b32.xlu0 %v881, 16
          %v1102 = vpop.permute.xlu0 %1101
          %1103 = vrot.lane.b32.xlu0 %v882, 16
          %v1104 = vpop.permute.xlu0 %1103
          %1105 = vrot.lane.b32.xlu0 %v883, 16
          %v1106 = vpop.permute.xlu0 %1105
          %1107 = vrot.lane.b32.xlu0 %v884, 16
          %v1108 = vpop.permute.xlu0 %1107
          %1109 = vrot.lane.b32.xlu0 %v885, 16
          %v1110 = vpop.permute.xlu0 %1109
          %1111 = vrot.lane.b32.xlu0 %v886, 16
          %v1112 = vpop.permute.xlu0 %1111
          %1113 = vrot.lane.b32.xlu0 %v887, 16
          %v1114 = vpop.permute.xlu0 %1113
          %1115 = vrot.lane.b32.xlu0 %v888, 16
          %v1116 = vpop.permute.xlu0 %1115
          %1117 = vrot.lane.b32.xlu0 %v889, 16
          %v1118 = vpop.permute.xlu0 %1117
          %vm1151 = vcmask 158848
          %1152 = vst.msk [vmem:[#allocation3] sm:$0xf] %vm1151, %v1056
          %1153 = vst.msk [vmem:[#allocation3 + $0x4] sm:$0xf] %vm1151, %v1058
          %1154 = vst.msk [vmem:[#allocation3 + $0x8] sm:$0xf] %vm1151, %v1060
          %1155 = vst.msk [vmem:[#allocation3 + $0xc] sm:$0xf] %vm1151, %v1062
          %1156 = vst.msk [vmem:[#allocation3 + $0x10] sm:$0xf] %vm1151, %v1064
          %1157 = vst.msk [vmem:[#allocation3 + $0x14] sm:$0xf] %vm1151, %v1066
          %1158 = vst.msk [vmem:[#allocation3 + $0x18] sm:$0xf] %vm1151, %v1068
          %1159 = vst.msk [vmem:[#allocation3 + $0x1c] sm:$0xf] %vm1151, %v1070
          %1160 = vst.msk [vmem:[#allocation3 + $0x20] sm:$0xf] %vm1151, %v1072
          %1161 = vst.msk [vmem:[#allocation3 + $0x24] sm:$0xf] %vm1151, %v1074
          %1162 = vst.msk [vmem:[#allocation3 + $0x28] sm:$0xf] %vm1151, %v1076
          %1163 = vst.msk [vmem:[#allocation3 + $0x2c] sm:$0xf] %vm1151, %v1078
          %1164 = vst.msk [vmem:[#allocation3 + $0x30] sm:$0xf] %vm1151, %v1080
          %1165 = vst.msk [vmem:[#allocation3 + $0x34] sm:$0xf] %vm1151, %v1082
          %1166 = vst.msk [vmem:[#allocation3 + $0x38] sm:$0xf] %vm1151, %v1084
          %1167 = vst.msk [vmem:[#allocation3 + $0x3c] sm:$0xf] %vm1151, %v1086
          %1168 = vst.msk [vmem:[#allocation3 + $0x40] sm:$0xf] %vm1151, %v1088
          %1169 = vst.msk [vmem:[#allocation3 + $0x44] sm:$0xf] %vm1151, %v1090
          %1170 = vst.msk [vmem:[#allocation3 + $0x48] sm:$0xf] %vm1151, %v1092
          %1171 = vst.msk [vmem:[#allocation3 + $0x4c] sm:$0xf] %vm1151, %v1094
          %1172 = vst.msk [vmem:[#allocation3 + $0x50] sm:$0xf] %vm1151, %v1096
          %1173 = vst.msk [vmem:[#allocation3 + $0x54] sm:$0xf] %vm1151, %v1098
          %1174 = vst.msk [vmem:[#allocation3 + $0x58] sm:$0xf] %vm1151, %v1100
          %1175 = vst.msk [vmem:[#allocation3 + $0x5c] sm:$0xf] %vm1151, %v1102
          %1176 = vst.msk [vmem:[#allocation3 + $0x60] sm:$0xf] %vm1151, %v1104
          %1177 = vst.msk [vmem:[#allocation3 + $0x64] sm:$0xf] %vm1151, %v1106
          %1178 = vst.msk [vmem:[#allocation3 + $0x68] sm:$0xf] %vm1151, %v1108
          %1179 = vst.msk [vmem:[#allocation3 + $0x6c] sm:$0xf] %vm1151, %v1110
          %1180 = vst.msk [vmem:[#allocation3 + $0x70] sm:$0xf] %vm1151, %v1112
          %1181 = vst.msk [vmem:[#allocation3 + $0x74] sm:$0xf] %vm1151, %v1114
          %1182 = vst.msk [vmem:[#allocation3 + $0x78] sm:$0xf] %vm1151, %v1116
          %1183 = vst.msk [vmem:[#allocation3 + $0x7c] sm:$0xf] %vm1151, %v1118
          %1186 = vrot.lane.b32.xlu0 %v860, 28
          %v1187 = vpop.permute.xlu0 %1186
          %1188 = vrot.lane.b32.xlu0 %v861, 28
          %v1189 = vpop.permute.xlu0 %1188
          %1190 = vrot.lane.b32.xlu0 %v862, 28
          %v1191 = vpop.permute.xlu0 %1190
          %1192 = vrot.lane.b32.xlu0 %v863, 28
          %v1193 = vpop.permute.xlu0 %1192
          %1194 = vrot.lane.b32.xlu0 %v864, 28
          %v1195 = vpop.permute.xlu0 %1194
          %1196 = vrot.lane.b32.xlu0 %v865, 28
          %v1197 = vpop.permute.xlu0 %1196
          %1198 = vrot.lane.b32.xlu0 %v866, 28
          %v1199 = vpop.permute.xlu0 %1198
          %1200 = vrot.lane.b32.xlu0 %v867, 28
          %v1201 = vpop.permute.xlu0 %1200
          %1202 = vrot.lane.b32.xlu0 %v868, 28
          %v1203 = vpop.permute.xlu0 %1202
          %1204 = vrot.lane.b32.xlu0 %v869, 28
          %v1205 = vpop.permute.xlu0 %1204
          %1206 = vrot.lane.b32.xlu0 %v870, 28
          %v1207 = vpop.permute.xlu0 %1206
          %1208 = vrot.lane.b32.xlu0 %v871, 28
          %v1209 = vpop.permute.xlu0 %1208
          %1210 = vrot.lane.b32.xlu0 %v872, 28
          %v1211 = vpop.permute.xlu0 %1210
          %1212 = vrot.lane.b32.xlu0 %v873, 28
          %v1213 = vpop.permute.xlu0 %1212
          %1214 = vrot.lane.b32.xlu0 %v874, 28
          %v1215 = vpop.permute.xlu0 %1214
          %1216 = vrot.lane.b32.xlu0 %v875, 28
          %v1217 = vpop.permute.xlu0 %1216
          %1218 = vrot.lane.b32.xlu0 %v876, 28
          %v1219 = vpop.permute.xlu0 %1218
          %1220 = vrot.lane.b32.xlu0 %v877, 28
          %v1221 = vpop.permute.xlu0 %1220
          %1222 = vrot.lane.b32.xlu0 %v878, 28
          %v1223 = vpop.permute.xlu0 %1222
          %1224 = vrot.lane.b32.xlu0 %v879, 28
          %v1225 = vpop.permute.xlu0 %1224
          %1226 = vrot.lane.b32.xlu0 %v880, 28
          %v1227 = vpop.permute.xlu0 %1226
          %1228 = vrot.lane.b32.xlu0 %v881, 28
          %v1229 = vpop.permute.xlu0 %1228
          %1230 = vrot.lane.b32.xlu0 %v882, 28
          %v1231 = vpop.permute.xlu0 %1230
          %1232 = vrot.lane.b32.xlu0 %v883, 28
          %v1233 = vpop.permute.xlu0 %1232
          %1234 = vrot.lane.b32.xlu0 %v884, 28
          %v1235 = vpop.permute.xlu0 %1234
          %1236 = vrot.lane.b32.xlu0 %v885, 28
          %v1237 = vpop.permute.xlu0 %1236
          %1238 = vrot.lane.b32.xlu0 %v886, 28
          %v1239 = vpop.permute.xlu0 %1238
          %1240 = vrot.lane.b32.xlu0 %v887, 28
          %v1241 = vpop.permute.xlu0 %1240
          %1242 = vrot.lane.b32.xlu0 %v888, 28
          %v1243 = vpop.permute.xlu0 %1242
          %1244 = vrot.lane.b32.xlu0 %v889, 28
          %v1245 = vpop.permute.xlu0 %1244
          %1246 = vrot.lane.b32.xlu0 %v890, 28
          %v1247 = vpop.permute.xlu0 %1246
          %1248 = vrot.lane.b32.xlu0 %v891, 28
          %v1249 = vpop.permute.xlu0 %1248
          %vm1282 = vcmask 257248
          %1283 = vst.msk [vmem:[#allocation3] sm:$0xf] %vm1282, %v1187
          %1284 = vst.msk [vmem:[#allocation3 + $0x4] sm:$0xf] %vm1282, %v1189
          %1285 = vst.msk [vmem:[#allocation3 + $0x8] sm:$0xf] %vm1282, %v1191
          %1286 = vst.msk [vmem:[#allocation3 + $0xc] sm:$0xf] %vm1282, %v1193
          %1287 = vst.msk [vmem:[#allocation3 + $0x10] sm:$0xf] %vm1282, %v1195
          %1288 = vst.msk [vmem:[#allocation3 + $0x14] sm:$0xf] %vm1282, %v1197
          %1289 = vst.msk [vmem:[#allocation3 + $0x18] sm:$0xf] %vm1282, %v1199
          %1290 = vst.msk [vmem:[#allocation3 + $0x1c] sm:$0xf] %vm1282, %v1201
          %1291 = vst.msk [vmem:[#allocation3 + $0x20] sm:$0xf] %vm1282, %v1203
          %1292 = vst.msk [vmem:[#allocation3 + $0x24] sm:$0xf] %vm1282, %v1205
          %1293 = vst.msk [vmem:[#allocation3 + $0x28] sm:$0xf] %vm1282, %v1207
          %1294 = vst.msk [vmem:[#allocation3 + $0x2c] sm:$0xf] %vm1282, %v1209
          %1295 = vst.msk [vmem:[#allocation3 + $0x30] sm:$0xf] %vm1282, %v1211
          %1296 = vst.msk [vmem:[#allocation3 + $0x34] sm:$0xf] %vm1282, %v1213
          %1297 = vst.msk [vmem:[#allocation3 + $0x38] sm:$0xf] %vm1282, %v1215
          %1298 = vst.msk [vmem:[#allocation3 + $0x3c] sm:$0xf] %vm1282, %v1217
          %1299 = vst.msk [vmem:[#allocation3 + $0x40] sm:$0xf] %vm1282, %v1219
          %1300 = vst.msk [vmem:[#allocation3 + $0x44] sm:$0xf] %vm1282, %v1221
          %1301 = vst.msk [vmem:[#allocation3 + $0x48] sm:$0xf] %vm1282, %v1223
          %1302 = vst.msk [vmem:[#allocation3 + $0x4c] sm:$0xf] %vm1282, %v1225
          %1303 = vst.msk [vmem:[#allocation3 + $0x50] sm:$0xf] %vm1282, %v1227
          %1304 = vst.msk [vmem:[#allocation3 + $0x54] sm:$0xf] %vm1282, %v1229
          %1305 = vst.msk [vmem:[#allocation3 + $0x58] sm:$0xf] %vm1282, %v1231
          %1306 = vst.msk [vmem:[#allocation3 + $0x5c] sm:$0xf] %vm1282, %v1233
          %1307 = vst.msk [vmem:[#allocation3 + $0x60] sm:$0xf] %vm1282, %v1235
          %1308 = vst.msk [vmem:[#allocation3 + $0x64] sm:$0xf] %vm1282, %v1237
          %1309 = vst.msk [vmem:[#allocation3 + $0x68] sm:$0xf] %vm1282, %v1239
          %1310 = vst.msk [vmem:[#allocation3 + $0x6c] sm:$0xf] %vm1282, %v1241
          %1311 = vst.msk [vmem:[#allocation3 + $0x70] sm:$0xf] %vm1282, %v1243
          %1312 = vst.msk [vmem:[#allocation3 + $0x74] sm:$0xf] %vm1282, %v1245
          %1313 = vst.msk [vmem:[#allocation3 + $0x78] sm:$0xf] %vm1282, %v1247
          %1314 = vst.msk [vmem:[#allocation3 + $0x7c] sm:$0xf] %vm1282, %v1249
          %v1315 = vrot.slane %v330, 1
          %v1316 = vrot.slane %v334, 1
          %v1317 = vrot.slane %v338, 1
          %v1318 = vrot.slane %v342, 1
          %v1319 = vrot.slane %v346, 1
          %v1320 = vrot.slane %v350, 1
          %v1321 = vrot.slane %v354, 1
          %v1322 = vrot.slane %v358, 1
          %v1323 = vrot.slane %v362, 1
          %v1324 = vrot.slane %v366, 1
          %v1325 = vrot.slane %v370, 1
          %v1326 = vrot.slane %v374, 1
          %v1327 = vrot.slane %v378, 1
          %v1328 = vrot.slane %v382, 1
          %v1329 = vrot.slane %v386, 1
          %v1330 = vrot.slane %v390, 1
          %v1331 = vrot.slane %v394, 1
          %v1332 = vrot.slane %v398, 1
          %v1333 = vrot.slane %v331, 1
          %v1334 = vrot.slane %v335, 1
          %v1335 = vrot.slane %v339, 1
          %v1336 = vrot.slane %v343, 1
          %v1337 = vrot.slane %v347, 1
          %v1338 = vrot.slane %v351, 1
          %v1339 = vrot.slane %v355, 1
          %v1340 = vrot.slane %v359, 1
          %v1341 = vrot.slane %v363, 1
          %v1342 = vrot.slane %v367, 1
          %v1343 = vrot.slane %v371, 1
          %v1344 = vrot.slane %v375, 1
          %v1345 = vrot.slane %v379, 1
          %v1346 = vrot.slane %v383, 1
          %v1347 = vrot.slane %v387, 1
          %v1348 = vrot.slane %v391, 1
          %v1349 = vrot.slane %v395, 1
          %v1350 = vrot.slane %v399, 1
          %v1351 = vrot.slane %v332, 1
          %v1352 = vrot.slane %v336, 1
          %v1353 = vrot.slane %v340, 1
          %v1354 = vrot.slane %v344, 1
          %v1355 = vrot.slane %v348, 1
          %v1356 = vrot.slane %v352, 1
          %v1357 = vrot.slane %v356, 1
          %v1358 = vrot.slane %v360, 1
          %v1359 = vrot.slane %v364, 1
          %v1360 = vrot.slane %v368, 1
          %v1361 = vrot.slane %v372, 1
          %v1362 = vrot.slane %v376, 1
          %v1363 = vrot.slane %v380, 1
          %v1364 = vrot.slane %v384, 1
          %v1365 = vrot.slane %v388, 1
          %v1366 = vrot.slane %v392, 1
          %v1367 = vrot.slane %v396, 1
          %v1368 = vrot.slane %v400, 1
          %vm1369 = vcmp.lt.s32.totalorder %v457, 7
          %v1370 = vsel %vm1369, %v1333, %v1351
          %v1371 = vsel %vm1369, %v1334, %v1352
          %v1372 = vsel %vm1369, %v1335, %v1353
          %v1373 = vsel %vm1369, %v1336, %v1354
          %v1374 = vsel %vm1369, %v1337, %v1355
          %v1375 = vsel %vm1369, %v1338, %v1356
          %v1376 = vsel %vm1369, %v1339, %v1357
          %v1377 = vsel %vm1369, %v1340, %v1358
          %v1378 = vsel %vm1369, %v1341, %v1359
          %v1379 = vsel %vm1369, %v1342, %v1360
          %v1380 = vsel %vm1369, %v1343, %v1361
          %v1381 = vsel %vm1369, %v1344, %v1362
          %v1382 = vsel %vm1369, %v1345, %v1363
          %v1383 = vsel %vm1369, %v1346, %v1364
          %v1384 = vsel %vm1369, %v1347, %v1365
          %v1385 = vsel %vm1369, %v1348, %v1366
          %v1386 = vsel %vm1369, %v1349, %v1367
          %v1387 = vsel %vm1369, %v1350, %v1368
          %v1388 = vsel %vm1369, %v1315, %v1333
          %v1389 = vsel %vm1369, %v1316, %v1334
          %v1390 = vsel %vm1369, %v1317, %v1335
          %v1391 = vsel %vm1369, %v1318, %v1336
          %v1392 = vsel %vm1369, %v1319, %v1337
          %v1393 = vsel %vm1369, %v1320, %v1338
          %v1394 = vsel %vm1369, %v1321, %v1339
          %v1395 = vsel %vm1369, %v1322, %v1340
          %v1396 = vsel %vm1369, %v1323, %v1341
          %v1397 = vsel %vm1369, %v1324, %v1342
          %v1398 = vsel %vm1369, %v1325, %v1343
          %v1399 = vsel %vm1369, %v1326, %v1344
          %v1400 = vsel %vm1369, %v1327, %v1345
          %v1401 = vsel %vm1369, %v1328, %v1346
          %v1402 = vsel %vm1369, %v1329, %v1347
          %v1403 = vsel %vm1369, %v1330, %v1348
          %v1404 = vsel %vm1369, %v1331, %v1349
          %v1405 = vsel %vm1369, %v1332, %v1350
          %v1406 = vpack.c.bf16 %v1388, %v1388
          %v1407 = vpack.c.bf16 %v1370, %v1370
          %v1408 = vpack.c.bf16 %v1389, %v1389
          %v1409 = vpack.c.bf16 %v1371, %v1371
          %v1410 = vpack.c.bf16 %v1390, %v1390
          %v1411 = vpack.c.bf16 %v1372, %v1372
          %v1412 = vpack.c.bf16 %v1391, %v1391
          %v1413 = vpack.c.bf16 %v1373, %v1373
          %v1414 = vpack.c.bf16 %v1392, %v1392
          %v1415 = vpack.c.bf16 %v1374, %v1374
          %v1416 = vpack.c.bf16 %v1393, %v1393
          %v1417 = vpack.c.bf16 %v1375, %v1375
          %v1418 = vpack.c.bf16 %v1394, %v1394
          %v1419 = vpack.c.bf16 %v1376, %v1376
          %v1420 = vpack.c.bf16 %v1395, %v1395
          %v1421 = vpack.c.bf16 %v1377, %v1377
          %v1422 = vpack.c.bf16 %v1396, %v1396
          %v1423 = vpack.c.bf16 %v1378, %v1378
          %v1424 = vpack.c.bf16 %v1397, %v1397
          %v1425 = vpack.c.bf16 %v1379, %v1379
          %v1426 = vpack.c.bf16 %v1398, %v1398
          %v1427 = vpack.c.bf16 %v1380, %v1380
          %v1428 = vpack.c.bf16 %v1399, %v1399
          %v1429 = vpack.c.bf16 %v1381, %v1381
          %v1430 = vpack.c.bf16 %v1400, %v1400
          %v1431 = vpack.c.bf16 %v1382, %v1382
          %v1432 = vpack.c.bf16 %v1401, %v1401
          %v1433 = vpack.c.bf16 %v1383, %v1383
          %v1434 = vpack.c.bf16 %v1402, %v1402
          %v1435 = vpack.c.bf16 %v1384, %v1384
          %v1436 = vpack.c.bf16 %v1403, %v1403
          %v1437 = vpack.c.bf16 %v1385, %v1385
          %v1438 = vpack.c.bf16 %v1404, %v1404
          %v1439 = vpack.c.bf16 %v1386, %v1386
          %v1440 = vpack.c.bf16 %v1405, %v1405
          %v1441 = vpack.c.bf16 %v1387, %v1387
          %1474 = vrot.lane.b32.xlu0 %v1406, 8
          %v1475 = vpop.permute.xlu0 %1474
          %1476 = vrot.lane.b32.xlu0 %v1407, 8
          %v1477 = vpop.permute.xlu0 %1476
          %1478 = vrot.lane.b32.xlu0 %v1408, 8
          %v1479 = vpop.permute.xlu0 %1478
          %1480 = vrot.lane.b32.xlu0 %v1409, 8
          %v1481 = vpop.permute.xlu0 %1480
          %1482 = vrot.lane.b32.xlu0 %v1410, 8
          %v1483 = vpop.permute.xlu0 %1482
          %1484 = vrot.lane.b32.xlu0 %v1411, 8
          %v1485 = vpop.permute.xlu0 %1484
          %1486 = vrot.lane.b32.xlu0 %v1412, 8
          %v1487 = vpop.permute.xlu0 %1486
          %1488 = vrot.lane.b32.xlu0 %v1413, 8
          %v1489 = vpop.permute.xlu0 %1488
          %1490 = vrot.lane.b32.xlu0 %v1414, 8
          %v1491 = vpop.permute.xlu0 %1490
          %1492 = vrot.lane.b32.xlu0 %v1415, 8
          %v1493 = vpop.permute.xlu0 %1492
          %1494 = vrot.lane.b32.xlu0 %v1416, 8
          %v1495 = vpop.permute.xlu0 %1494
          %1496 = vrot.lane.b32.xlu0 %v1417, 8
          %v1497 = vpop.permute.xlu0 %1496
          %1498 = vrot.lane.b32.xlu0 %v1418, 8
          %v1499 = vpop.permute.xlu0 %1498
          %1500 = vrot.lane.b32.xlu0 %v1419, 8
          %v1501 = vpop.permute.xlu0 %1500
          %1502 = vrot.lane.b32.xlu0 %v1420, 8
          %v1503 = vpop.permute.xlu0 %1502
          %1504 = vrot.lane.b32.xlu0 %v1421, 8
          %v1505 = vpop.permute.xlu0 %1504
          %1506 = vrot.lane.b32.xlu0 %v1422, 8
          %v1507 = vpop.permute.xlu0 %1506
          %1508 = vrot.lane.b32.xlu0 %v1423, 8
          %v1509 = vpop.permute.xlu0 %1508
          %1510 = vrot.lane.b32.xlu0 %v1424, 8
          %v1511 = vpop.permute.xlu0 %1510
          %1512 = vrot.lane.b32.xlu0 %v1425, 8
          %v1513 = vpop.permute.xlu0 %1512
          %1514 = vrot.lane.b32.xlu0 %v1426, 8
          %v1515 = vpop.permute.xlu0 %1514
          %1516 = vrot.lane.b32.xlu0 %v1427, 8
          %v1517 = vpop.permute.xlu0 %1516
          %1518 = vrot.lane.b32.xlu0 %v1428, 8
          %v1519 = vpop.permute.xlu0 %1518
          %1520 = vrot.lane.b32.xlu0 %v1429, 8
          %v1521 = vpop.permute.xlu0 %1520
          %1522 = vrot.lane.b32.xlu0 %v1430, 8
          %v1523 = vpop.permute.xlu0 %1522
          %1524 = vrot.lane.b32.xlu0 %v1431, 8
          %v1525 = vpop.permute.xlu0 %1524
          %1526 = vrot.lane.b32.xlu0 %v1432, 8
          %v1527 = vpop.permute.xlu0 %1526
          %1528 = vrot.lane.b32.xlu0 %v1433, 8
          %v1529 = vpop.permute.xlu0 %1528
          %1530 = vrot.lane.b32.xlu0 %v1434, 8
          %v1531 = vpop.permute.xlu0 %1530
          %1532 = vrot.lane.b32.xlu0 %v1435, 8
          %v1533 = vpop.permute.xlu0 %1532
          %1534 = vrot.lane.b32.xlu0 %v1436, 8
          %v1535 = vpop.permute.xlu0 %1534
          %1536 = vrot.lane.b32.xlu0 %v1437, 8
          %v1537 = vpop.permute.xlu0 %1536
          %vm1570 = vcmask 93248
          %1571 = vst.msk [vmem:[#allocation3] sm:$0xf] %vm1570, %v1475
          %1572 = vst.msk [vmem:[#allocation3 + $0x4] sm:$0xf] %vm1570, %v1477
          %1573 = vst.msk [vmem:[#allocation3 + $0x8] sm:$0xf] %vm1570, %v1479
          %1574 = vst.msk [vmem:[#allocation3 + $0xc] sm:$0xf] %vm1570, %v1481
          %1575 = vst.msk [vmem:[#allocation3 + $0x10] sm:$0xf] %vm1570, %v1483
          %1576 = vst.msk [vmem:[#allocation3 + $0x14] sm:$0xf] %vm1570, %v1485
          %1577 = vst.msk [vmem:[#allocation3 + $0x18] sm:$0xf] %vm1570, %v1487
          %1578 = vst.msk [vmem:[#allocation3 + $0x1c] sm:$0xf] %vm1570, %v1489
          %1579 = vst.msk [vmem:[#allocation3 + $0x20] sm:$0xf] %vm1570, %v1491
          %1580 = vst.msk [vmem:[#allocation3 + $0x24] sm:$0xf] %vm1570, %v1493
          %1581 = vst.msk [vmem:[#allocation3 + $0x28] sm:$0xf] %vm1570, %v1495
          %1582 = vst.msk [vmem:[#allocation3 + $0x2c] sm:$0xf] %vm1570, %v1497
          %1583 = vst.msk [vmem:[#allocation3 + $0x30] sm:$0xf] %vm1570, %v1499
          %1584 = vst.msk [vmem:[#allocation3 + $0x34] sm:$0xf] %vm1570, %v1501
          %1585 = vst.msk [vmem:[#allocation3 + $0x38] sm:$0xf] %vm1570, %v1503
          %1586 = vst.msk [vmem:[#allocation3 + $0x3c] sm:$0xf] %vm1570, %v1505
          %1587 = vst.msk [vmem:[#allocation3 + $0x40] sm:$0xf] %vm1570, %v1507
          %1588 = vst.msk [vmem:[#allocation3 + $0x44] sm:$0xf] %vm1570, %v1509
          %1589 = vst.msk [vmem:[#allocation3 + $0x48] sm:$0xf] %vm1570, %v1511
          %1590 = vst.msk [vmem:[#allocation3 + $0x4c] sm:$0xf] %vm1570, %v1513
          %1591 = vst.msk [vmem:[#allocation3 + $0x50] sm:$0xf] %vm1570, %v1515
          %1592 = vst.msk [vmem:[#allocation3 + $0x54] sm:$0xf] %vm1570, %v1517
          %1593 = vst.msk [vmem:[#allocation3 + $0x58] sm:$0xf] %vm1570, %v1519
          %1594 = vst.msk [vmem:[#allocation3 + $0x5c] sm:$0xf] %vm1570, %v1521
          %1595 = vst.msk [vmem:[#allocation3 + $0x60] sm:$0xf] %vm1570, %v1523
          %1596 = vst.msk [vmem:[#allocation3 + $0x64] sm:$0xf] %vm1570, %v1525
          %1597 = vst.msk [vmem:[#allocation3 + $0x68] sm:$0xf] %vm1570, %v1527
          %1598 = vst.msk [vmem:[#allocation3 + $0x6c] sm:$0xf] %vm1570, %v1529
          %1599 = vst.msk [vmem:[#allocation3 + $0x70] sm:$0xf] %vm1570, %v1531
          %1600 = vst.msk [vmem:[#allocation3 + $0x74] sm:$0xf] %vm1570, %v1533
          %1601 = vst.msk [vmem:[#allocation3 + $0x78] sm:$0xf] %vm1570, %v1535
          %1602 = vst.msk [vmem:[#allocation3 + $0x7c] sm:$0xf] %vm1570, %v1537
          %1605 = vrot.lane.b32.xlu0 %v1408, 20
          %v1606 = vpop.permute.xlu0 %1605
          %1607 = vrot.lane.b32.xlu0 %v1409, 20
          %v1608 = vpop.permute.xlu0 %1607
          %1609 = vrot.lane.b32.xlu0 %v1410, 20
          %v1610 = vpop.permute.xlu0 %1609
          %1611 = vrot.lane.b32.xlu0 %v1411, 20
          %v1612 = vpop.permute.xlu0 %1611
          %1613 = vrot.lane.b32.xlu0 %v1412, 20
          %v1614 = vpop.permute.xlu0 %1613
          %1615 = vrot.lane.b32.xlu0 %v1413, 20
          %v1616 = vpop.permute.xlu0 %1615
          %1617 = vrot.lane.b32.xlu0 %v1414, 20
          %v1618 = vpop.permute.xlu0 %1617
          %1619 = vrot.lane.b32.xlu0 %v1415, 20
          %v1620 = vpop.permute.xlu0 %1619
          %1621 = vrot.lane.b32.xlu0 %v1416, 20
          %v1622 = vpop.permute.xlu0 %1621
          %1623 = vrot.lane.b32.xlu0 %v1417, 20
          %v1624 = vpop.permute.xlu0 %1623
          %1625 = vrot.lane.b32.xlu0 %v1418, 20
          %v1626 = vpop.permute.xlu0 %1625
          %1627 = vrot.lane.b32.xlu0 %v1419, 20
          %v1628 = vpop.permute.xlu0 %1627
          %1629 = vrot.lane.b32.xlu0 %v1420, 20
          %v1630 = vpop.permute.xlu0 %1629
          %1631 = vrot.lane.b32.xlu0 %v1421, 20
          %v1632 = vpop.permute.xlu0 %1631
          %1633 = vrot.lane.b32.xlu0 %v1422, 20
          %v1634 = vpop.permute.xlu0 %1633
          %1635 = vrot.lane.b32.xlu0 %v1423, 20
          %v1636 = vpop.permute.xlu0 %1635
          %1637 = vrot.lane.b32.xlu0 %v1424, 20
          %v1638 = vpop.permute.xlu0 %1637
          %1639 = vrot.lane.b32.xlu0 %v1425, 20
          %v1640 = vpop.permute.xlu0 %1639
          %1641 = vrot.lane.b32.xlu0 %v1426, 20
          %v1642 = vpop.permute.xlu0 %1641
          %1643 = vrot.lane.b32.xlu0 %v1427, 20
          %v1644 = vpop.permute.xlu0 %1643
          %1645 = vrot.lane.b32.xlu0 %v1428, 20
          %v1646 = vpop.permute.xlu0 %1645
          %1647 = vrot.lane.b32.xlu0 %v1429, 20
          %v1648 = vpop.permute.xlu0 %1647
          %1649 = vrot.lane.b32.xlu0 %v1430, 20
          %v1650 = vpop.permute.xlu0 %1649
          %1651 = vrot.lane.b32.xlu0 %v1431, 20
          %v1652 = vpop.permute.xlu0 %1651
          %1653 = vrot.lane.b32.xlu0 %v1432, 20
          %v1654 = vpop.permute.xlu0 %1653
          %1655 = vrot.lane.b32.xlu0 %v1433, 20
          %v1656 = vpop.permute.xlu0 %1655
          %1657 = vrot.lane.b32.xlu0 %v1434, 20
          %v1658 = vpop.permute.xlu0 %1657
          %1659 = vrot.lane.b32.xlu0 %v1435, 20
          %v1660 = vpop.permute.xlu0 %1659
          %1661 = vrot.lane.b32.xlu0 %v1436, 20
          %v1662 = vpop.permute.xlu0 %1661
          %1663 = vrot.lane.b32.xlu0 %v1437, 20
          %v1664 = vpop.permute.xlu0 %1663
          %1665 = vrot.lane.b32.xlu0 %v1438, 20
          %v1666 = vpop.permute.xlu0 %1665
          %1667 = vrot.lane.b32.xlu0 %v1439, 20
          %v1668 = vpop.permute.xlu0 %1667
          %vm1701 = vcmask 191648
          %1702 = vst.msk [vmem:[#allocation3] sm:$0xf] %vm1701, %v1606
          %1703 = vst.msk [vmem:[#allocation3 + $0x4] sm:$0xf] %vm1701, %v1608
          %1704 = vst.msk [vmem:[#allocation3 + $0x8] sm:$0xf] %vm1701, %v1610
          %1705 = vst.msk [vmem:[#allocation3 + $0xc] sm:$0xf] %vm1701, %v1612
          %1706 = vst.msk [vmem:[#allocation3 + $0x10] sm:$0xf] %vm1701, %v1614
          %1707 = vst.msk [vmem:[#allocation3 + $0x14] sm:$0xf] %vm1701, %v1616
          %1708 = vst.msk [vmem:[#allocation3 + $0x18] sm:$0xf] %vm1701, %v1618
          %1709 = vst.msk [vmem:[#allocation3 + $0x1c] sm:$0xf] %vm1701, %v1620
          %1710 = vst.msk [vmem:[#allocation3 + $0x20] sm:$0xf] %vm1701, %v1622
          %1711 = vst.msk [vmem:[#allocation3 + $0x24] sm:$0xf] %vm1701, %v1624
          %1712 = vst.msk [vmem:[#allocation3 + $0x28] sm:$0xf] %vm1701, %v1626
          %1713 = vst.msk [vmem:[#allocation3 + $0x2c] sm:$0xf] %vm1701, %v1628
          %1714 = vst.msk [vmem:[#allocation3 + $0x30] sm:$0xf] %vm1701, %v1630
          %1715 = vst.msk [vmem:[#allocation3 + $0x34] sm:$0xf] %vm1701, %v1632
          %1716 = vst.msk [vmem:[#allocation3 + $0x38] sm:$0xf] %vm1701, %v1634
          %1717 = vst.msk [vmem:[#allocation3 + $0x3c] sm:$0xf] %vm1701, %v1636
          %1718 = vst.msk [vmem:[#allocation3 + $0x40] sm:$0xf] %vm1701, %v1638
          %1719 = vst.msk [vmem:[#allocation3 + $0x44] sm:$0xf] %vm1701, %v1640
          %1720 = vst.msk [vmem:[#allocation3 + $0x48] sm:$0xf] %vm1701, %v1642
          %1721 = vst.msk [vmem:[#allocation3 + $0x4c] sm:$0xf] %vm1701, %v1644
          %1722 = vst.msk [vmem:[#allocation3 + $0x50] sm:$0xf] %vm1701, %v1646
          %1723 = vst.msk [vmem:[#allocation3 + $0x54] sm:$0xf] %vm1701, %v1648
          %1724 = vst.msk [vmem:[#allocation3 + $0x58] sm:$0xf] %vm1701, %v1650
          %1725 = vst.msk [vmem:[#allocation3 + $0x5c] sm:$0xf] %vm1701, %v1652
          %1726 = vst.msk [vmem:[#allocation3 + $0x60] sm:$0xf] %vm1701, %v1654
          %1727 = vst.msk [vmem:[#allocation3 + $0x64] sm:$0xf] %vm1701, %v1656
          %1728 = vst.msk [vmem:[#allocation3 + $0x68] sm:$0xf] %vm1701, %v1658
          %1729 = vst.msk [vmem:[#allocation3 + $0x6c] sm:$0xf] %vm1701, %v1660
          %1730 = vst.msk [vmem:[#allocation3 + $0x70] sm:$0xf] %vm1701, %v1662
          %1731 = vst.msk [vmem:[#allocation3 + $0x74] sm:$0xf] %vm1701, %v1664
          %1732 = vst.msk [vmem:[#allocation3 + $0x78] sm:$0xf] %vm1701, %v1666
          %1733 = vst.msk [vmem:[#allocation3 + $0x7c] sm:$0xf] %vm1701, %v1668
          %1736 = vrot.lane.b32.xlu0 %v1410, 32
          %v1737 = vpop.permute.xlu0 %1736
          %1738 = vrot.lane.b32.xlu0 %v1411, 32
          %v1739 = vpop.permute.xlu0 %1738
          %1740 = vrot.lane.b32.xlu0 %v1412, 32
          %v1741 = vpop.permute.xlu0 %1740
          %1742 = vrot.lane.b32.xlu0 %v1413, 32
          %v1743 = vpop.permute.xlu0 %1742
          %1744 = vrot.lane.b32.xlu0 %v1414, 32
          %v1745 = vpop.permute.xlu0 %1744
          %1746 = vrot.lane.b32.xlu0 %v1415, 32
          %v1747 = vpop.permute.xlu0 %1746
          %1748 = vrot.lane.b32.xlu0 %v1416, 32
          %v1749 = vpop.permute.xlu0 %1748
          %1750 = vrot.lane.b32.xlu0 %v1417, 32
          %v1751 = vpop.permute.xlu0 %1750
          %1752 = vrot.lane.b32.xlu0 %v1418, 32
          %v1753 = vpop.permute.xlu0 %1752
          %1754 = vrot.lane.b32.xlu0 %v1419, 32
          %v1755 = vpop.permute.xlu0 %1754
          %1756 = vrot.lane.b32.xlu0 %v1420, 32
          %v1757 = vpop.permute.xlu0 %1756
          %1758 = vrot.lane.b32.xlu0 %v1421, 32
          %v1759 = vpop.permute.xlu0 %1758
          %1760 = vrot.lane.b32.xlu0 %v1422, 32
          %v1761 = vpop.permute.xlu0 %1760
          %1762 = vrot.lane.b32.xlu0 %v1423, 32
          %v1763 = vpop.permute.xlu0 %1762
          %1764 = vrot.lane.b32.xlu0 %v1424, 32
          %v1765 = vpop.permute.xlu0 %1764
          %1766 = vrot.lane.b32.xlu0 %v1425, 32
          %v1767 = vpop.permute.xlu0 %1766
          %1768 = vrot.lane.b32.xlu0 %v1426, 32
          %v1769 = vpop.permute.xlu0 %1768
          %1770 = vrot.lane.b32.xlu0 %v1427, 32
          %v1771 = vpop.permute.xlu0 %1770
          %1772 = vrot.lane.b32.xlu0 %v1428, 32
          %v1773 = vpop.permute.xlu0 %1772
          %1774 = vrot.lane.b32.xlu0 %v1429, 32
          %v1775 = vpop.permute.xlu0 %1774
          %1776 = vrot.lane.b32.xlu0 %v1430, 32
          %v1777 = vpop.permute.xlu0 %1776
          %1778 = vrot.lane.b32.xlu0 %v1431, 32
          %v1779 = vpop.permute.xlu0 %1778
          %1780 = vrot.lane.b32.xlu0 %v1432, 32
          %v1781 = vpop.permute.xlu0 %1780
          %1782 = vrot.lane.b32.xlu0 %v1433, 32
          %v1783 = vpop.permute.xlu0 %1782
          %1784 = vrot.lane.b32.xlu0 %v1434, 32
          %v1785 = vpop.permute.xlu0 %1784
          %1786 = vrot.lane.b32.xlu0 %v1435, 32
          %v1787 = vpop.permute.xlu0 %1786
          %1788 = vrot.lane.b32.xlu0 %v1436, 32
          %v1789 = vpop.permute.xlu0 %1788
          %1790 = vrot.lane.b32.xlu0 %v1437, 32
          %v1791 = vpop.permute.xlu0 %1790
          %1792 = vrot.lane.b32.xlu0 %v1438, 32
          %v1793 = vpop.permute.xlu0 %1792
          %1794 = vrot.lane.b32.xlu0 %v1439, 32
          %v1795 = vpop.permute.xlu0 %1794
          %1796 = vrot.lane.b32.xlu0 %v1440, 32
          %v1797 = vpop.permute.xlu0 %1796
          %1798 = vrot.lane.b32.xlu0 %v1441, 32
          %v1799 = vpop.permute.xlu0 %1798
          %vm1832 = vcmask 290048
          %1833 = vst.msk [vmem:[#allocation3] sm:$0xf] %vm1832, %v1737
          %1834 = vst.msk [vmem:[#allocation3 + $0x4] sm:$0xf] %vm1832, %v1739
          %1835 = vst.msk [vmem:[#allocation3 + $0x8] sm:$0xf] %vm1832, %v1741
          %1836 = vst.msk [vmem:[#allocation3 + $0xc] sm:$0xf] %vm1832, %v1743
          %1837 = vst.msk [vmem:[#allocation3 + $0x10] sm:$0xf] %vm1832, %v1745
          %1838 = vst.msk [vmem:[#allocation3 + $0x14] sm:$0xf] %vm1832, %v1747
          %1839 = vst.msk [vmem:[#allocation3 + $0x18] sm:$0xf] %vm1832, %v1749
          %1840 = vst.msk [vmem:[#allocation3 + $0x1c] sm:$0xf] %vm1832, %v1751
          %1841 = vst.msk [vmem:[#allocation3 + $0x20] sm:$0xf] %vm1832, %v1753
          %1842 = vst.msk [vmem:[#allocation3 + $0x24] sm:$0xf] %vm1832, %v1755
          %1843 = vst.msk [vmem:[#allocation3 + $0x28] sm:$0xf] %vm1832, %v1757
          %1844 = vst.msk [vmem:[#allocation3 + $0x2c] sm:$0xf] %vm1832, %v1759
          %1845 = vst.msk [vmem:[#allocation3 + $0x30] sm:$0xf] %vm1832, %v1761
          %1846 = vst.msk [vmem:[#allocation3 + $0x34] sm:$0xf] %vm1832, %v1763
          %1847 = vst.msk [vmem:[#allocation3 + $0x38] sm:$0xf] %vm1832, %v1765
          %1848 = vst.msk [vmem:[#allocation3 + $0x3c] sm:$0xf] %vm1832, %v1767
          %1849 = vst.msk [vmem:[#allocation3 + $0x40] sm:$0xf] %vm1832, %v1769
          %1850 = vst.msk [vmem:[#allocation3 + $0x44] sm:$0xf] %vm1832, %v1771
          %1851 = vst.msk [vmem:[#allocation3 + $0x48] sm:$0xf] %vm1832, %v1773
          %1852 = vst.msk [vmem:[#allocation3 + $0x4c] sm:$0xf] %vm1832, %v1775
          %1853 = vst.msk [vmem:[#allocation3 + $0x50] sm:$0xf] %vm1832, %v1777
          %1854 = vst.msk [vmem:[#allocation3 + $0x54] sm:$0xf] %vm1832, %v1779
          %1855 = vst.msk [vmem:[#allocation3 + $0x58] sm:$0xf] %vm1832, %v1781
          %1856 = vst.msk [vmem:[#allocation3 + $0x5c] sm:$0xf] %vm1832, %v1783
          %1857 = vst.msk [vmem:[#allocation3 + $0x60] sm:$0xf] %vm1832, %v1785
          %1858 = vst.msk [vmem:[#allocation3 + $0x64] sm:$0xf] %vm1832, %v1787
          %1859 = vst.msk [vmem:[#allocation3 + $0x68] sm:$0xf] %vm1832, %v1789
          %1860 = vst.msk [vmem:[#allocation3 + $0x6c] sm:$0xf] %vm1832, %v1791
          %1861 = vst.msk [vmem:[#allocation3 + $0x70] sm:$0xf] %vm1832, %v1793
          %1862 = vst.msk [vmem:[#allocation3 + $0x74] sm:$0xf] %vm1832, %v1795
          %1863 = vst.msk [vmem:[#allocation3 + $0x78] sm:$0xf] %vm1832, %v1797
          %1864 = vst.msk [vmem:[#allocation3 + $0x7c] sm:$0xf] %vm1832, %v1799
        $region36: #{tpu_custom_call.1} parent=31 // pred_fallthru
          _
        %v1865 = vld [vmem:[#allocation3] sm:$0xf]
        %v1866 = vld [vmem:[#allocation3 + $0x4] sm:$0xf]
        %v1867 = vld [vmem:[#allocation3 + $0x8] sm:$0xf]
        %v1868 = vld [vmem:[#allocation3 + $0xc] sm:$0xf]
        %v1869 = vld [vmem:[#allocation3 + $0x10] sm:$0xf]
        %v1870 = vld [vmem:[#allocation3 + $0x14] sm:$0xf]
        %v1871 = vld [vmem:[#allocation3 + $0x18] sm:$0xf]
        %v1872 = vld [vmem:[#allocation3 + $0x1c] sm:$0xf]
        %v1873 = vld [vmem:[#allocation3 + $0x20] sm:$0xf]
        %v1874 = vld [vmem:[#allocation3 + $0x24] sm:$0xf]
        %v1875 = vld [vmem:[#allocation3 + $0x28] sm:$0xf]
        %v1876 = vld [vmem:[#allocation3 + $0x2c] sm:$0xf]
        %v1877 = vld [vmem:[#allocation3 + $0x30] sm:$0xf]
        %v1878 = vld [vmem:[#allocation3 + $0x34] sm:$0xf]
        %v1879 = vld [vmem:[#allocation3 + $0x38] sm:$0xf]
        %v1880 = vld [vmem:[#allocation3 + $0x3c] sm:$0xf]
        %v1881 = vld [vmem:[#allocation3 + $0x40] sm:$0xf]
        %v1882 = vld [vmem:[#allocation3 + $0x44] sm:$0xf]
        %v1883 = vld [vmem:[#allocation3 + $0x48] sm:$0xf]
        %v1884 = vld [vmem:[#allocation3 + $0x4c] sm:$0xf]
        %v1885 = vld [vmem:[#allocation3 + $0x50] sm:$0xf]
        %v1886 = vld [vmem:[#allocation3 + $0x54] sm:$0xf]
        %v1887 = vld [vmem:[#allocation3 + $0x58] sm:$0xf]
        %v1888 = vld [vmem:[#allocation3 + $0x5c] sm:$0xf]
        %v1889 = vld [vmem:[#allocation3 + $0x60] sm:$0xf]
        %v1890 = vld [vmem:[#allocation3 + $0x64] sm:$0xf]
        %v1891 = vld [vmem:[#allocation3 + $0x68] sm:$0xf]
        %v1892 = vld [vmem:[#allocation3 + $0x6c] sm:$0xf]
        %v1893 = vld [vmem:[#allocation3 + $0x70] sm:$0xf]
        %v1894 = vld [vmem:[#allocation3 + $0x74] sm:$0xf]
        %v1895 = vld [vmem:[#allocation3 + $0x78] sm:$0xf]
        %v1896 = vld [vmem:[#allocation3 + $0x7c] sm:$0xf]
        %v1897 = vld [vmem:[%s210] sm:$0xf]
        %v1898 = vld [vmem:[%s210 + $0x4] sm:$0xf]
        %v1899 = vld [vmem:[%s210 + $0x8] sm:$0xf]
        %v1900 = vld [vmem:[%s210 + $0xc] sm:$0xf]
        %v1901 = vld [vmem:[%s210 + $0x10] sm:$0x3]
        %v1934 = vunpack.c.l.b16 %v1865
        %v1935 = vunpack.c.l.b16 %v1866
        %v1936 = vunpack.c.l.b16 %v1867
        %v1937 = vunpack.c.l.b16 %v1868
        %v1938 = vunpack.c.l.b16 %v1869
        %v1939 = vunpack.c.l.b16 %v1870
        %v1940 = vunpack.c.l.b16 %v1871
        %v1941 = vunpack.c.l.b16 %v1872
        %v1942 = vunpack.c.l.b16 %v1873
        %v1943 = vunpack.c.l.b16 %v1874
        %v1944 = vunpack.c.l.b16 %v1875
        %v1945 = vunpack.c.l.b16 %v1876
        %v1946 = vunpack.c.l.b16 %v1877
        %v1947 = vunpack.c.l.b16 %v1878
        %v1948 = vunpack.c.l.b16 %v1879
        %v1949 = vunpack.c.l.b16 %v1880
        %v1950 = vunpack.c.l.b16 %v1881
        %v1951 = vunpack.c.l.b16 %v1882
        %v1952 = vunpack.c.l.b16 %v1883
        %v1953 = vunpack.c.l.b16 %v1884
        %v1954 = vunpack.c.l.b16 %v1885
        %v1955 = vunpack.c.l.b16 %v1886
        %v1956 = vunpack.c.l.b16 %v1887
        %v1957 = vunpack.c.l.b16 %v1888
        %v1958 = vunpack.c.l.b16 %v1889
        %v1959 = vunpack.c.l.b16 %v1890
        %v1960 = vunpack.c.l.b16 %v1891
        %v1961 = vunpack.c.l.b16 %v1892
        %v1962 = vunpack.c.l.b16 %v1893
        %v1963 = vunpack.c.l.b16 %v1894
        %v1964 = vunpack.c.l.b16 %v1895
        %v1965 = vunpack.c.l.b16 %v1896
        %v1966 = vpack.c.b16 %v1935, %v1934
        %v1967 = vpack.c.b16 %v1937, %v1936
        %v1968 = vpack.c.b16 %v1939, %v1938
        %v1969 = vpack.c.b16 %v1941, %v1940
        %v1970 = vpack.c.b16 %v1943, %v1942
        %v1971 = vpack.c.b16 %v1945, %v1944
        %v1972 = vpack.c.b16 %v1947, %v1946
        %v1973 = vpack.c.b16 %v1949, %v1948
        %v1974 = vpack.c.b16 %v1951, %v1950
        %v1975 = vpack.c.b16 %v1953, %v1952
        %v1976 = vpack.c.b16 %v1955, %v1954
        %v1977 = vpack.c.b16 %v1957, %v1956
        %v1978 = vpack.c.b16 %v1959, %v1958
        %v1979 = vpack.c.b16 %v1961, %v1960
        %v1980 = vpack.c.b16 %v1963, %v1962
        %v1981 = vpack.c.b16 %v1965, %v1964
        %v1987 = vunpack.c.l.b16 %v1897
        %v1988 = vunpack.c.l.b16 %v1898
        %v1989 = vunpack.c.l.b16 %v1899
        %v1990 = vunpack.c.l.b16 %v1900
        %v1991 = vunpack.c.l.b16 %v1901
        %v1992 = vpack.c.b16 %v1988, %v1987
        %v1993 = vpack.c.b16 %v1990, %v1989
        %v1994 = vpack.c.b16 %v1991, %v1991
        %vm1997 = vcmask 293888
        %v1999 = vsel %vm1997, %v1966, 0
        %v2002 = vsel %vm1997, %v1967, 0
        %v2005 = vsel %vm1997, %v1968, 0
        %v2008 = vsel %vm1997, %v1969, 0
        %v2011 = vsel %vm1997, %v1970, 0
        %v2014 = vsel %vm1997, %v1971, 0
        %v2017 = vsel %vm1997, %v1972, 0
        %v2020 = vsel %vm1997, %v1973, 0
        %v2023 = vsel %vm1997, %v1974, 0
        %v2026 = vsel %vm1997, %v1975, 0
        %v2029 = vsel %vm1997, %v1976, 0
        %v2032 = vsel %vm1997, %v1977, 0
        %v2035 = vsel %vm1997, %v1978, 0
        %v2038 = vsel %vm1997, %v1979, 0
        %v2041 = vsel %vm1997, %v1980, 0
        %v2044 = vsel %vm1997, %v1981, 0
        %vm2046 = vcmask 1041408
        %v2048 = vsel %vm2046, %v1994, 0
        %2050 = vmatpush.bf16.msra.mxu0 0
        %2051 = vmatpush.bf16.msra.mxu0 0
        %2052 = vmatpush.bf16.msra.mxu0 0
        %2053 = vmatpush.bf16.msra.mxu0 0
        %2054 = vmatpush.bf16.msra.mxu0 0
        %2055 = vmatpush.bf16.msra.mxu0 %v2048
        %2056 = vmatpush.bf16.msra.mxu0 %v1993
        %2057 = vmatpush.bf16.msra.mxu0 %v1992
        %2058 = vmatmul.bf16.gmra.mxu0 %v1999
        %v2059 = vpop.f32.mrf.mxu0
        %v2060 = vadd.f32 0.0, %v2059
        %v2061 = vpop.f32.mrf.mxu0
        %v2062 = vadd.f32 0.0, %v2061
        %2063 = vmatmul.bf16.gmra.mxu0 %v2002
        %v2064 = vpop.f32.mrf.mxu0
        %v2065 = vadd.f32 0.0, %v2064
        %v2066 = vpop.f32.mrf.mxu0
        %v2067 = vadd.f32 0.0, %v2066
        %2068 = vmatmul.bf16.gmra.mxu0 %v2005
        %v2069 = vpop.f32.mrf.mxu0
        %v2070 = vadd.f32 0.0, %v2069
        %v2071 = vpop.f32.mrf.mxu0
        %v2072 = vadd.f32 0.0, %v2071
        %2073 = vmatmul.bf16.gmra.mxu0 %v2008
        %v2074 = vpop.f32.mrf.mxu0
        %v2075 = vadd.f32 0.0, %v2074
        %v2076 = vpop.f32.mrf.mxu0
        %v2077 = vadd.f32 0.0, %v2076
        %2078 = vmatmul.bf16.gmra.mxu0 %v2011
        %v2079 = vpop.f32.mrf.mxu0
        %v2080 = vadd.f32 0.0, %v2079
        %v2081 = vpop.f32.mrf.mxu0
        %v2082 = vadd.f32 0.0, %v2081
        %2083 = vmatmul.bf16.gmra.mxu0 %v2014
        %v2084 = vpop.f32.mrf.mxu0
        %v2085 = vadd.f32 0.0, %v2084
        %v2086 = vpop.f32.mrf.mxu0
        %v2087 = vadd.f32 0.0, %v2086
        %2088 = vmatmul.bf16.gmra.mxu0 %v2017
        %v2089 = vpop.f32.mrf.mxu0
        %v2090 = vadd.f32 0.0, %v2089
        %v2091 = vpop.f32.mrf.mxu0
        %v2092 = vadd.f32 0.0, %v2091
        %2093 = vmatmul.bf16.gmra.mxu0 %v2020
        %v2094 = vpop.f32.mrf.mxu0
        %v2095 = vadd.f32 0.0, %v2094
        %v2096 = vpop.f32.mrf.mxu0
        %v2097 = vadd.f32 0.0, %v2096
        %2098 = vmatmul.bf16.gmra.mxu0 %v2023
        %v2099 = vpop.f32.mrf.mxu0
        %v2100 = vadd.f32 0.0, %v2099
        %v2101 = vpop.f32.mrf.mxu0
        %v2102 = vadd.f32 0.0, %v2101
        %2103 = vmatmul.bf16.gmra.mxu0 %v2026
        %v2104 = vpop.f32.mrf.mxu0
        %v2105 = vadd.f32 0.0, %v2104
        %v2106 = vpop.f32.mrf.mxu0
        %v2107 = vadd.f32 0.0, %v2106
        %2108 = vmatmul.bf16.gmra.mxu0 %v2029
        %v2109 = vpop.f32.mrf.mxu0
        %v2110 = vadd.f32 0.0, %v2109
        %v2111 = vpop.f32.mrf.mxu0
        %v2112 = vadd.f32 0.0, %v2111
        %2113 = vmatmul.bf16.gmra.mxu0 %v2032
        %v2114 = vpop.f32.mrf.mxu0
        %v2115 = vadd.f32 0.0, %v2114
        %v2116 = vpop.f32.mrf.mxu0
        %v2117 = vadd.f32 0.0, %v2116
        %2118 = vmatmul.bf16.gmra.mxu0 %v2035
        %v2119 = vpop.f32.mrf.mxu0
        %v2120 = vadd.f32 0.0, %v2119
        %v2121 = vpop.f32.mrf.mxu0
        %v2122 = vadd.f32 0.0, %v2121
        %2123 = vmatmul.bf16.gmra.mxu0 %v2038
        %v2124 = vpop.f32.mrf.mxu0
        %v2125 = vadd.f32 0.0, %v2124
        %v2126 = vpop.f32.mrf.mxu0
        %v2127 = vadd.f32 0.0, %v2126
        %2128 = vmatmul.bf16.gmra.mxu0 %v2041
        %v2129 = vpop.f32.mrf.mxu0
        %v2130 = vadd.f32 0.0, %v2129
        %v2131 = vpop.f32.mrf.mxu0
        %v2132 = vadd.f32 0.0, %v2131
        %2133 = vmatmul.bf16.gmra.mxu0 %v2044
        %v2134 = vpop.f32.mrf.mxu0
        %v2135 = vadd.f32 0.0, %v2134
        %v2136 = vpop.f32.mrf.mxu0
        %v2137 = vadd.f32 0.0, %v2136
        %2138 = vdwg.mxu0
        %v2139 = vld [vmem:[%s213] sm:$0x1]
        %v2141 = vperm.slane %v2139, 0
        %v2143 = vadd.f32 %v2060, %v2141
        %v2144 = vadd.f32 %v2062, %v2141
        %v2145 = vadd.f32 %v2065, %v2141
        %v2146 = vadd.f32 %v2067, %v2141
        %v2147 = vadd.f32 %v2070, %v2141
        %v2148 = vadd.f32 %v2072, %v2141
        %v2149 = vadd.f32 %v2075, %v2141
        %v2150 = vadd.f32 %v2077, %v2141
        %v2151 = vadd.f32 %v2080, %v2141
        %v2152 = vadd.f32 %v2082, %v2141
        %v2153 = vadd.f32 %v2085, %v2141
        %v2154 = vadd.f32 %v2087, %v2141
        %v2155 = vadd.f32 %v2090, %v2141
        %v2156 = vadd.f32 %v2092, %v2141
        %v2157 = vadd.f32 %v2095, %v2141
        %v2158 = vadd.f32 %v2097, %v2141
        %v2159 = vadd.f32 %v2100, %v2141
        %v2160 = vadd.f32 %v2102, %v2141
        %v2161 = vadd.f32 %v2105, %v2141
        %v2162 = vadd.f32 %v2107, %v2141
        %v2163 = vadd.f32 %v2110, %v2141
        %v2164 = vadd.f32 %v2112, %v2141
        %v2165 = vadd.f32 %v2115, %v2141
        %v2166 = vadd.f32 %v2117, %v2141
        %v2167 = vadd.f32 %v2120, %v2141
        %v2168 = vadd.f32 %v2122, %v2141
        %v2169 = vadd.f32 %v2125, %v2141
        %v2170 = vadd.f32 %v2127, %v2141
        %v2171 = vadd.f32 %v2130, %v2141
        %v2172 = vadd.f32 %v2132, %v2141
        %v2173 = vadd.f32 %v2135, %v2141
        %v2174 = vadd.f32 %v2137, %v2141
        %2175 = vst [vmem:[%s201] sm:$0xff] %v2143
        %2176 = vst [vmem:[%s201 + $0x8] sm:$0xff] %v2144
        %2177 = vst [vmem:[%s201 + $0x10] sm:$0xff] %v2145
        %2178 = vst [vmem:[%s201 + $0x18] sm:$0xff] %v2146
        %2179 = vst [vmem:[%s201 + $0x20] sm:$0xff] %v2147
        %2180 = vst [vmem:[%s201 + $0x28] sm:$0xff] %v2148
        %2181 = vst [vmem:[%s201 + $0x30] sm:$0xff] %v2149
        %2182 = vst [vmem:[%s201 + $0x38] sm:$0xff] %v2150
        %2183 = vst [vmem:[%s201 + $0x40] sm:$0xff] %v2151
        %2184 = vst [vmem:[%s201 + $0x48] sm:$0xff] %v2152
        %2185 = vst [vmem:[%s201 + $0x50] sm:$0xff] %v2153
        %2186 = vst [vmem:[%s201 + $0x58] sm:$0xff] %v2154
        %2187 = vst [vmem:[%s201 + $0x60] sm:$0xff] %v2155
        %2188 = vst [vmem:[%s201 + $0x68] sm:$0xff] %v2156
        %2189 = vst [vmem:[%s201 + $0x70] sm:$0xff] %v2157
        %2190 = vst [vmem:[%s201 + $0x78] sm:$0xff] %v2158
        %2191 = vst [vmem:[%s201 + $0x80] sm:$0xff] %v2159
        %2192 = vst [vmem:[%s201 + $0x88] sm:$0xff] %v2160
        %2193 = vst [vmem:[%s201 + $0x90] sm:$0xff] %v2161
        %2194 = vst [vmem:[%s201 + $0x98] sm:$0xff] %v2162
        %2195 = vst [vmem:[%s201 + $0xa0] sm:$0xff] %v2163
        %2196 = vst [vmem:[%s201 + $0xa8] sm:$0xff] %v2164
        %2197 = vst [vmem:[%s201 + $0xb0] sm:$0xff] %v2165
        %2198 = vst [vmem:[%s201 + $0xb8] sm:$0xff] %v2166
        %2199 = vst [vmem:[%s201 + $0xc0] sm:$0xff] %v2167
        %2200 = vst [vmem:[%s201 + $0xc8] sm:$0xff] %v2168
        %2201 = vst [vmem:[%s201 + $0xd0] sm:$0xff] %v2169
        %2202 = vst [vmem:[%s201 + $0xd8] sm:$0xff] %v2170
        %2203 = vst [vmem:[%s201 + $0xe0] sm:$0xff] %v2171
        %2204 = vst [vmem:[%s201 + $0xe8] sm:$0xff] %v2172
        %2205 = vst [vmem:[%s201 + $0xf0] sm:$0xff] %v2173
        %2206 = vst [vmem:[%s201 + $0xf8] sm:$0xff] %v2174
        %s2207 = sand.u32 %s117, 1
        %s2208 = scalar_lea.sflag [#allocation5], %s2207
        %s2209 = sand.u32 %s117, 1
        %s2210 = smul.addr %s2209, 256
        %s2211 = scalar_lea.vmem [#allocation4], %s2210
        // Predicated region
        $region37: #{tpu_custom_call.1} parent=31 // pred_check
          %p2212 = pneg %p127
        $region38: #{tpu_custom_call.1} parent=31 // pred_check_branch
          %2214 = sbr.rel (%p2212) target = $region40
        $region39: #{tpu_custom_call.1} parent=31 // pred_region
          %2216 = vsyncadd %s2208, 0
          %s2217 = smul.addr %s21, 32
          %s2218 = sadd.s32 %s22, %s2217
          %s2219 = smul.addr %s2218, 8
          %s2220 = scalar_lea.hbm %s3, %s2219
          %s2221 = sshll.u32 %s2211, 4
          %s2222 = int_to_ptr.vmem [resolvable:$true] %s2221
          %s2223 = sshll.u32 %s2220, 4
          %s2224 = int_to_ptr.hbm [resolvable:$true] %s2223
          %2229 = dma.vmem_to_hbm [thread:$0]  %s2222, 4096, %s2224, %s2208, 128, 128, 8
        $region40: #{tpu_custom_call.1} parent=31 // pred_fallthru
          _
      $region32: #{tpu_custom_call.1} parent=5 // pred_fallthru
        _
      %p2230 = scmp.le.s32.totalorder 2, %s12
      // Predicated region
      $region41: #{tpu_custom_call.1} parent=5 // pred_check
        %p2231 = pneg %p2230
      $region42: #{tpu_custom_call.1} parent=5 // pred_check_branch
        %2233 = sbr.rel (%p2231) target = $region44
      $region43: #{tpu_custom_call.1} parent=5 // pred_region
        %s2234 = ssub.s32 %s12, 2
        // Predicated region
        $region45: #{tpu_custom_call.1} parent=43 // pred_check
          %p2235 = pneg %p133
        $region46: #{tpu_custom_call.1} parent=43 // pred_check_branch
          %2237 = sbr.rel (%p2235) target = $region48
        $region47: #{tpu_custom_call.1} parent=43 // pred_region
          %s2238 = sand.u32 %s118, 1
          %s2239 = scalar_lea.sflag [#allocation5], %s2238
          %s2240 = sand.u32 %s118, 1
          %s2241 = smul.addr %s2240, 256
          %s2242 = scalar_lea.vmem [#allocation4], %s2241
          %2244 = dma.done %s2239, 4096
        $region48: #{tpu_custom_call.1} parent=43 // pred_fallthru
          _
      $region44: #{tpu_custom_call.1} parent=5 // pred_fallthru
        _
    $region6: #{tpu_custom_call.1} parent=1 // loop_footer
      %s16 = sadd.s32 1, %s12
    $region7: #{tpu_custom_call.1} parent=1 // loop_footer_branch
      %11 = sbr.rel target = $region3
    $region8: #{tpu_custom_call.1} parent=1 // loop_exit
      _
    %2245 = vsyncpa [#allocation5], 1
    %s2246 = scalar_lea.sflag [#allocation5], 1
    %2247 = vsyncpa %s2246, 1

</llo_original>
